<compile_context>
chip_gen: v5e
topology: v5e:2x2
jax: 0.10.0
libtpu: 0.0.40
codegen_flags: <defaults>
</compile_context>

<pallas_src>
import functools
import math

import jax
import jax.numpy as jnp
import numpy as np
from jax.experimental import pallas as pl
from jax.experimental.pallas import tpu as pltpu

EPS = 1e-5
KH = KW = 10          # Singleconv kernel size (padding=9, dilation=2)
KH2 = KW2 = KH + 1    # parity-extended 11x11 kernel (shift folded into weights)


def _round_up(x, m):
    return -(-x // m) * m


# -----------------------------------------------------------------------------
# Fused kernel: one grid step = (image n, output parity p).
#
# Wide-row flat layout: an (H, W) plane is stored as H rows of stride Wst
# (data cols [0, W), zero cols [W, Wst)), flattened to H*Wst lanes.  The
# dilated conv for this parity is a VALID 11x11 conv (parity-extended weights)
# of the parity sub-image of concat([x2, deconv(x)]): one K = Cmid*11 matmul
# over a zero-padded flat buffer plus 11 lane-shifted adds.
# -----------------------------------------------------------------------------
def _decode_fused_kernel(xw_ref, x2w_ref, wdec_ref, b1f_ref, mask_ref,
                         wbig_ref, b2f_ref, out_ref, zp_ref, pmat_ref,
                         usum_ref, *, HWf, Wst, Cmid, Cout, t0, NUpad, LP, cdt):
    f32 = jnp.float32

    # ---- Stage 1: ConvTranspose2d(k=2,s=2) + BN1 + ReLU for this parity ----
    # (f32; BN1 scale folded into wdec, bias into b1f; mask zeroes pad cols)
    ydec = jnp.dot(wdec_ref[0], xw_ref[0], preferred_element_type=f32)
    ydec = jnp.maximum(ydec + b1f_ref[...], 0.0) * mask_ref[...]

    # ---- Stage 2: concat([x2_par, ydec]) into the zero-padded conv buffer --
    # Only the halo fringes are zeroed; the data window is fully overwritten,
    # so no full-buffer clear is needed.
    zp_ref[:, :t0] = jnp.zeros((Cmid, t0), cdt)
    zp_ref[:, t0 + HWf:] = jnp.zeros((Cmid, LP - t0 - HWf), cdt)
    zp_ref[:, t0:t0 + HWf] = jnp.concatenate(
        [x2w_ref[0, 0], ydec.astype(cdt)], axis=0)

    # ---- Stage 3: 11x11 parity-extended conv + BN2 + ReLU -------------------
    # Build the (KH2*Cmid, NUpad) patch matrix from 11 contiguous lane slices,
    # one deep-K bf16 matmul with f32 accumulation, then 11 shifted adds.
    for kh in range(KH2):
        s = t0 + (kh - 5) * Wst - 5                           # static
        pmat_ref[kh * Cmid:(kh + 1) * Cmid, :] = zp_ref[:, s:s + NUpad]
    usum_ref[...] = jnp.dot(wbig_ref[0], pmat_ref[...],
                            preferred_element_type=f32)        # (KW2*Cout, NUpad)

    out_ref[0, 0] = jnp.broadcast_to(b2f_ref[...], (Cout, HWf))
    for kw in range(KW2):
        out_ref[0, 0] += usum_ref[kw * Cout:(kw + 1) * Cout, kw:kw + HWf]
    out_ref[0, 0] = jnp.maximum(out_ref[0, 0], 0.0)


# -----------------------------------------------------------------------------
# Decode.forward (public API: NCHW in / NCHW out, PyTorch convention)
# -----------------------------------------------------------------------------
def decode_forward(x, x2, params, *, compute_dtype=jnp.bfloat16):
    """x: (N, Cin, H, W), x2: (N, C2, 2H, 2W)  ->  (N, Cout, 2H, 2W)."""
    N, Cin, H, W = x.shape
    N2, C2, H2, W2 = x2.shape
    assert N2 == N and H2 == 2 * H and W2 == 2 * W

    wT, bT = params["deconv_w"], params["deconv_b"]        # (Cin,Cin,2,2),(Cin,)
    g1, b1, m1, v1 = params["bn1"]
    wc, bc = params["conv_w"], params["conv_b"]            # (Cout,Cmid,10,10),(Cout,)
    g2, b2, m2, v2 = params["bn2"]
    Cout, Cmid, kh_, kw_ = wc.shape
    assert (kh_, kw_) == (KH, KW) and Cmid == C2 + Cin

    f32 = jnp.float32

    # Wide-row stride: >= W+5 for the conv halo, rounded so H*Wst % 128 == 0
    # (lane-dense stores / whole-vreg tiles everywhere).
    mult = 128 // math.gcd(H, 128)
    Wst = _round_up(W + 5, mult)
    HWf = H * Wst
    t0 = _round_up(5 * Wst + 5, 128)          # data-window start (lane aligned)
    NUpad = _round_up(HWf + KW2 - 1, 128)     # patch-matrix width (lane aligned)
    LP = _round_up(t0 + 5 * Wst - 5 + NUpad, 128)

    # ---- fold BN1 into the deconv weights; one (Cin,Cin) matrix per parity --
    s1 = g1 / jnp.sqrt(v1 + EPS)
    wdec = jnp.transpose(wT, (2, 3, 1, 0))[::-1, ::-1]     # [a,b,co,ci] = wT[ci,co,1-a,1-b]
    wdec = (wdec * s1[None, None, :, None]).reshape(4, Cin, Cin).astype(f32)
    b1f = ((bT - m1) * s1 + b1).reshape(Cin, 1).astype(f32)

    # ---- fold BN2 into the conv weights; parity-extend 10x10 -> 11x11 so the
    #      parity shift lives in (per-parity) weights and data placement is
    #      identical and static for every grid step --------------------------
    s2 = g2 / jnp.sqrt(v2 + EPS)
    wcf = wc * s2[:, None, None, None]                     # (Cout, Cmid, 10, 10)
    wbig = []
    for a in range(2):
        for b in range(2):
            wext = jnp.pad(wcf, ((0, 0), (0, 0), (a, 1 - a), (b, 1 - b)))
            wbig.append(jnp.transpose(wext, (3, 0, 2, 1))   # (kw, co, kh, c)
                        .reshape(KW2 * Cout, KH2 * Cmid))
    wbig = jnp.stack(wbig, 0).astype(compute_dtype)         # (4, 11*Cout, 11*Cmid)
    b2f = ((bc - m2) * s2 + b2).reshape(Cout, 1).astype(f32)

    # ---- wide-row flat inputs: channels on sublanes, H*Wst pixels on lanes --
    xw = jnp.pad(x, ((0, 0), (0, 0), (0, 0), (0, Wst - W)))
    xw = xw.reshape(N, Cin, HWf).astype(f32)
    # x2 sub-images indexed by OUTPUT parity: slot [a,b] = x2[..., (1-a)::2, (1-b)::2]
    x2p = x2.reshape(N, C2, H, 2, W, 2)
    x2p = jnp.transpose(x2p, (0, 3, 5, 1, 2, 4))[:, ::-1, ::-1]
    x2w = jnp.pad(x2p, ((0, 0),) * 5 + ((0, Wst - W),))
    x2w = x2w.reshape(N, 4, C2, HWf).astype(compute_dtype)
    mask = jnp.tile((jnp.arange(Wst) < W).astype(f32), (H,)).reshape(1, HWf)

    kernel = functools.partial(_decode_fused_kernel, HWf=HWf, Wst=Wst,
                               Cmid=Cmid, Cout=Cout, t0=t0, NUpad=NUpad,
                               LP=LP, cdt=compute_dtype)

    # VMEM budget: scratch + double-buffered in/out blocks, with margin.
    cs = jnp.dtype(compute_dtype).itemsize
    scratch_b = (Cmid * LP * cs + KH2 * Cmid * NUpad * cs
                 + KW2 * Cout * NUpad * 4)
    block_b = (Cin * HWf * 4 + C2 * HWf * cs + Cin * Cin * 4 + Cin * 4
               + HWf * 4 + KW2 * Cout * KH2 * Cmid * cs + Cout * 4
               + Cout * HWf * 4)
    vmem_limit = int(min(128 * 2 ** 20,
                         max(32 * 2 ** 20, 1.5 * (scratch_b + 2 * block_b))))

    outw = pl.pallas_call(
        kernel,
        out_shape=jax.ShapeDtypeStruct((N, 4, Cout, HWf), f32),
        grid_spec=pltpu.PrefetchScalarGridSpec(
            num_scalar_prefetch=0,
            grid=(N, 4),                       # parity is a parallel grid axis
            in_specs=[
                pl.BlockSpec((1, Cin, HWf), lambda n, p: (n, 0, 0)),
                pl.BlockSpec((1, 1, C2, HWf), lambda n, p: (n, p, 0, 0)),
                pl.BlockSpec((1, Cin, Cin), lambda n, p: (p, 0, 0)),
                pl.BlockSpec((Cin, 1), lambda n, p: (0, 0)),
                pl.BlockSpec((1, HWf), lambda n, p: (0, 0)),
                pl.BlockSpec((1, KW2 * Cout, KH2 * Cmid), lambda n, p: (p, 0, 0)),
                pl.BlockSpec((Cout, 1), lambda n, p: (0, 0)),
            ],
            out_specs=pl.BlockSpec((1, 1, Cout, HWf),
                                   lambda n, p: (n, p, 0, 0)),
            scratch_shapes=[
                pltpu.VMEM((Cmid, LP), compute_dtype),            # zp
                pltpu.VMEM((KH2 * Cmid, NUpad), compute_dtype),   # patch matrix
                pltpu.VMEM((KW2 * Cout, NUpad), f32),             # matmul result
            ],
        ),
        compiler_params=pltpu.CompilerParams(
            dimension_semantics=("parallel", "parallel"),
            vmem_limit_bytes=vmem_limit),
    )(xw, x2w, wdec, b1f, mask, wbig, b2f)

    # parity slabs (wide rows) -> NCHW
    out = outw.reshape(N, 2, 2, Cout, H, Wst)[..., :W]
    out = jnp.transpose(out, (0, 3, 4, 1, 5, 2)).reshape(N, Cout, 2 * H, 2 * W)
    return out


# -----------------------------------------------------------------------------
# Pure-JAX reference (eval-mode BN) for a numerical sanity check.
# -----------------------------------------------------------------------------
def decode_reference(x, x2, params):
    wT, bT = params["deconv_w"], params["deconv_b"]
    g1, b1, m1, v1 = params["bn1"]
    wc, bc = params["conv_w"], params["conv_b"]
    g2, b2, m2, v2 = params["bn2"]
    N, Cin, H, W = x.shape
    Cout_t = wT.shape[1]
    hp = jax.lax.Precision.HIGHEST

    t = jnp.einsum("ncij,cdab->ndiajb", x, wT, precision=hp)
    t = t.reshape(N, Cout_t, 2 * H, 2 * W) + bT[None, :, None, None]
    t = (t - m1[None, :, None, None]) / jnp.sqrt(v1 + EPS)[None, :, None, None] \
        * g1[None, :, None, None] + b1[None, :, None, None]
    t = jnp.maximum(t, 0.0)

    z = jnp.concatenate([x2, t], axis=1)
    y = jax.lax.conv_general_dilated(
        z, wc, window_strides=(1, 1), padding=((9, 9), (9, 9)),
        rhs_dilation=(2, 2), dimension_numbers=("NCHW", "OIHW", "NCHW"),
        precision=hp)
    y = y + bc[None, :, None, None]
    y = (y - m2[None, :, None, None]) / jnp.sqrt(v2 + EPS)[None, :, None, None] \
        * g2[None, :, None, None] + b2[None, :, None, None]
    return jnp.maximum(y, 0.0)


if __name__ == "__main__":
    key = jax.random.PRNGKey(0)
    ks = jax.random.split(key, 14)

    # Decode(in_channels=4, mid_channel=8, out_channels=8)
    N, Cin, H, W = 2, 4, 8, 8
    C2 = 4                        # skip-connection channels (mid - in)
    Cmid, Cout = C2 + Cin, 8

    x = jax.random.normal(ks[0], (N, Cin, H, W), jnp.float32)
    x2 = jax.random.normal(ks[1], (N, C2, 2 * H, 2 * W), jnp.float32)

    params = {
        "deconv_w": 0.1 * jax.random.normal(ks[2], (Cin, Cin, 2, 2), jnp.float32),
        "deconv_b": 0.1 * jax.random.normal(ks[3], (Cin,), jnp.float32),
        "bn1": (jax.random.uniform(ks[4], (Cin,), jnp.float32, 0.5, 1.5),
                0.1 * jax.random.normal(ks[5], (Cin,), jnp.float32),
                0.1 * jax.random.normal(ks[6], (Cin,), jnp.float32),
                jax.random.uniform(ks[7], (Cin,), jnp.float32, 0.5, 1.5)),
        "conv_w": 0.05 * jax.random.normal(ks[8], (Cout, Cmid, 10, 10), jnp.float32),
        "conv_b": 0.1 * jax.random.normal(ks[9], (Cout,), jnp.float32),
        "bn2": (jax.random.uniform(ks[10], (Cout,), jnp.float32, 0.5, 1.5),
                0.1 * jax.random.normal(ks[11], (Cout,), jnp.float32),
                0.1 * jax.random.normal(ks[12], (Cout,), jnp.float32),
                jax.random.uniform(ks[13], (Cout,), jnp.float32, 0.5, 1.5)),
    }

    ref = jax.block_until_ready(decode_reference(x, x2, params))

    # f32 compute path: exact-algorithm check (tight tolerance).
    out_f32 = jax.block_until_ready(
        decode_forward(x, x2, params, compute_dtype=jnp.float32))
    np.testing.assert_allclose(np.asarray(out_f32), np.asarray(ref),
                               rtol=2e-3, atol=2e-3)

    # default bf16 MXU path: tolerance loosened for bf16 operand rounding.
    out = jax.block_until_ready(decode_forward(x, x2, params))
    np.testing.assert_allclose(np.asarray(out), np.asarray(ref),
                               rtol=4e-2, atol=4e-2)
    print("KERNEL_OK")
</pallas_src>

<mosaic_0001>
module attributes {stable_mosaic.version = 11 : i64} {
  func.func @_decode_fused_kernel(%arg0: i32, %arg1: i32, %arg2: memref<1x4x128xf32, #tpu.memory_space<vmem>>, %arg3: memref<1x1x4x128xf32, #tpu.memory_space<vmem>>, %arg4: memref<1x4x4xf32, #tpu.memory_space<vmem>>, %arg5: memref<4x1xf32, #tpu.memory_space<vmem>>, %arg6: memref<1x128xf32, #tpu.memory_space<vmem>>, %arg7: memref<1x88x88xf32, #tpu.memory_space<vmem>>, %arg8: memref<8x1xf32, #tpu.memory_space<vmem>>, %arg9: memref<1x1x8x128xf32, #tpu.memory_space<vmem>>, %arg10: memref<8x512xf32, #tpu.memory_space<vmem>>, %arg11: memref<88x256xf32, #tpu.memory_space<vmem>>, %arg12: memref<88x256xf32, #tpu.memory_space<vmem>>) attributes {dimension_semantics = [#tpu.dimension_semantics<parallel>, #tpu.dimension_semantics<parallel>], iteration_bounds = array<i64: 2, 4>, scalar_prefetch = 0 : i64, scratch_operands = 3 : i64, tpu.core_type = #tpu.core_type<tc>, window_params = [{transform_indices = @transform_0, window_bounds = array<i64: 1, 4, 128>}, {transform_indices = @transform_1, window_bounds = array<i64: 1, 1, 4, 128>}, {transform_indices = @transform_2, window_bounds = array<i64: 1, 4, 4>}, {pipeline_mode = #tpu.pipeline_mode<synchronous>, transform_indices = @transform_3, window_bounds = array<i64: 4, 1>}, {pipeline_mode = #tpu.pipeline_mode<synchronous>, transform_indices = @transform_4, window_bounds = array<i64: 1, 128>}, {transform_indices = @transform_5, window_bounds = array<i64: 1, 88, 88>}, {pipeline_mode = #tpu.pipeline_mode<synchronous>, transform_indices = @transform_6, window_bounds = array<i64: 8, 1>}, {transform_indices = @transform_7, window_bounds = array<i64: 1, 1, 8, 128>}]} {
    %c0 = arith.constant 0 : index
    %c0_0 = arith.constant 0 : index
    %c0_1 = arith.constant 0 : index
    %0 = vector.load %arg4[%c0, %c0_0, %c0_1] : memref<1x4x4xf32, #tpu.memory_space<vmem>>, vector<1x4x4xf32>
    %1 = vector.shape_cast %0 : vector<1x4x4xf32> to vector<4x4xf32>
    %c0_2 = arith.constant 0 : index
    %c0_3 = arith.constant 0 : index
    %c0_4 = arith.constant 0 : index
    %2 = vector.load %arg2[%c0_2, %c0_3, %c0_4] : memref<1x4x128xf32, #tpu.memory_space<vmem>>, vector<1x4x128xf32>
    %3 = vector.shape_cast %2 : vector<1x4x128xf32> to vector<4x128xf32>
    %cst = arith.constant dense<0.000000e+00> : vector<4x128xf32>
    %4 = tpu.matmul %1, %3, %cst {dimension_numbers = #tpu.dot_dimension_numbers<[1], [0], [0], [1], [0, 0, 1, 1], [], []>} : vector<4x4xf32>, vector<4x128xf32>, vector<4x128xf32> -> vector<4x128xf32>
    %c0_5 = arith.constant 0 : index
    %c0_6 = arith.constant 0 : index
    %5 = vector.load %arg5[%c0_5, %c0_6] : memref<4x1xf32, #tpu.memory_space<vmem>>, vector<4x1xf32>
    %6 = vector.broadcast %5 : vector<4x1xf32> to vector<4x128xf32>
    %7 = arith.addf %4, %6 : vector<4x128xf32>
    %cst_7 = arith.constant 0.000000e+00 : f32
    %8 = vector.broadcast %cst_7 : f32 to vector<4x128xf32>
    %9 = arith.maximumf %7, %8 : vector<4x128xf32>
    %c0_8 = arith.constant 0 : index
    %c0_9 = arith.constant 0 : index
    %10 = vector.load %arg6[%c0_8, %c0_9] : memref<1x128xf32, #tpu.memory_space<vmem>>, vector<1x128xf32>
    %11 = vector.broadcast %10 : vector<1x128xf32> to vector<4x128xf32>
    %12 = arith.mulf %9, %11 : vector<4x128xf32>
    %cst_10 = arith.constant 0.000000e+00 : f32
    %13 = vector.broadcast %cst_10 : f32 to vector<8x128xf32>
    %c0_11 = arith.constant 0 : index
    %c0_12 = arith.constant 0 : index
    %14 = vector.load %arg10[%c0_11, %c0_12] : memref<8x512xf32, #tpu.memory_space<vmem>>, vector<8x128xf32>
    tpu.vector_store %arg10[%c0_11, %c0_12], %13 {strides = array<i32>} : memref<8x512xf32, #tpu.memory_space<vmem>>, vector<8x128xf32>,
    %cst_13 = arith.constant 0.000000e+00 : f32
    %15 = vector.broadcast %cst_13 : f32 to vector<8x256xf32>
    %c0_14 = arith.constant 0 : index
    %c256 = arith.constant 256 : index
    %16 = vector.load %arg10[%c0_14, %c256] : memref<8x512xf32, #tpu.memory_space<vmem>>, vector<8x256xf32>
    tpu.vector_store %arg10[%c0_14, %c256], %15 {strides = array<i32>} : memref<8x512xf32, #tpu.memory_space<vmem>>, vector<8x256xf32>,
    %c0_15 = arith.constant 0 : index
    %c0_16 = arith.constant 0 : index
    %c0_17 = arith.constant 0 : index
    %c0_18 = arith.constant 0 : index
    %17 = vector.load %arg3[%c0_15, %c0_16, %c0_17, %c0_18] : memref<1x1x4x128xf32, #tpu.memory_space<vmem>>, vector<1x1x4x128xf32>
    %18 = vector.shape_cast %17 : vector<1x1x4x128xf32> to vector<4x128xf32>
    %19 = tpu.concatenate %18, %12 in 0 : vector<4x128xf32>, vector<4x128xf32> -> vector<8x128xf32>
    %c0_19 = arith.constant 0 : index
    %c128 = arith.constant 128 : index
    %20 = vector.load %arg10[%c0_19, %c128] : memref<8x512xf32, #tpu.memory_space<vmem>>, vector<8x128xf32>
    tpu.vector_store %arg10[%c0_19, %c128], %19 {strides = array<i32>} : memref<8x512xf32, #tpu.memory_space<vmem>>, vector<8x128xf32>,
    %c0_20 = arith.constant 0 : index
    %c43 = arith.constant 43 : index
    %21 = vector.load %arg10[%c0_20, %c43] : memref<8x512xf32, #tpu.memory_space<vmem>>, vector<8x256xf32>
    %c0_21 = arith.constant 0 : index
    %c0_22 = arith.constant 0 : index
    %22 = vector.load %arg11[%c0_21, %c0_22] : memref<88x256xf32, #tpu.memory_space<vmem>>, vector<8x256xf32>
    tpu.vector_store %arg11[%c0_21, %c0_22], %21 {strides = array<i32>} : memref<88x256xf32, #tpu.memory_space<vmem>>, vector<8x256xf32>,
    %c0_23 = arith.constant 0 : index
    %c59 = arith.constant 59 : index
    %23 = vector.load %arg10[%c0_23, %c59] : memref<8x512xf32, #tpu.memory_space<vmem>>, vector<8x256xf32>
    %c8 = arith.constant 8 : index
    %c0_24 = arith.constant 0 : index
    %24 = vector.load %arg11[%c8, %c0_24] : memref<88x256xf32, #tpu.memory_space<vmem>>, vector<8x256xf32>
    tpu.vector_store %arg11[%c8, %c0_24], %23 {strides = array<i32>} : memref<88x256xf32, #tpu.memory_space<vmem>>, vector<8x256xf32>,
    %c0_25 = arith.constant 0 : index
    %c75 = arith.constant 75 : index
    %25 = vector.load %arg10[%c0_25, %c75] : memref<8x512xf32, #tpu.memory_space<vmem>>, vector<8x256xf32>
    %c16 = arith.constant 16 : index
    %c0_26 = arith.constant 0 : index
    %26 = vector.load %arg11[%c16, %c0_26] : memref<88x256xf32, #tpu.memory_space<vmem>>, vector<8x256xf32>
    tpu.vector_store %arg11[%c16, %c0_26], %25 {strides = array<i32>} : memref<88x256xf32, #tpu.memory_space<vmem>>, vector<8x256xf32>,
    %c0_27 = arith.constant 0 : index
    %c91 = arith.constant 91 : index
    %27 = vector.load %arg10[%c0_27, %c91] : memref<8x512xf32, #tpu.memory_space<vmem>>, vector<8x256xf32>
    %c24 = arith.constant 24 : index
    %c0_28 = arith.constant 0 : index
    %28 = vector.load %arg11[%c24, %c0_28] : memref<88x256xf32, #tpu.memory_space<vmem>>, vector<8x256xf32>
    tpu.vector_store %arg11[%c24, %c0_28], %27 {strides = array<i32>} : memref<88x256xf32, #tpu.memory_space<vmem>>, vector<8x256xf32>,
    %c0_29 = arith.constant 0 : index
    %c107 = arith.constant 107 : index
    %29 = vector.load %arg10[%c0_29, %c107] : memref<8x512xf32, #tpu.memory_space<vmem>>, vector<8x256xf32>
    %c32 = arith.constant 32 : index
    %c0_30 = arith.constant 0 : index
    %30 = vector.load %arg11[%c32, %c0_30] : memref<88x256xf32, #tpu.memory_space<vmem>>, vector<8x256xf32>
    tpu.vector_store %arg11[%c32, %c0_30], %29 {strides = array<i32>} : memref<88x256xf32, #tpu.memory_space<vmem>>, vector<8x256xf32>,
    %c0_31 = arith.constant 0 : index
    %c123 = arith.constant 123 : index
    %31 = vector.load %arg10[%c0_31, %c123] : memref<8x512xf32, #tpu.memory_space<vmem>>, vector<8x256xf32>
    %c40 = arith.constant 40 : index
    %c0_32 = arith.constant 0 : index
    %32 = vector.load %arg11[%c40, %c0_32] : memref<88x256xf32, #tpu.memory_space<vmem>>, vector<8x256xf32>
    tpu.vector_store %arg11[%c40, %c0_32], %31 {strides = array<i32>} : memref<88x256xf32, #tpu.memory_space<vmem>>, vector<8x256xf32>,
    %c0_33 = arith.constant 0 : index
    %c139 = arith.constant 139 : index
    %33 = vector.load %arg10[%c0_33, %c139] : memref<8x512xf32, #tpu.memory_space<vmem>>, vector<8x256xf32>
    %c48 = arith.constant 48 : index
    %c0_34 = arith.constant 0 : index
    %34 = vector.load %arg11[%c48, %c0_34] : memref<88x256xf32, #tpu.memory_space<vmem>>, vector<8x256xf32>
    tpu.vector_store %arg11[%c48, %c0_34], %33 {strides = array<i32>} : memref<88x256xf32, #tpu.memory_space<vmem>>, vector<8x256xf32>,
    %c0_35 = arith.constant 0 : index
    %c155 = arith.constant 155 : index
    %35 = vector.load %arg10[%c0_35, %c155] : memref<8x512xf32, #tpu.memory_space<vmem>>, vector<8x256xf32>
    %c56 = arith.constant 56 : index
    %c0_36 = arith.constant 0 : index
    %36 = vector.load %arg11[%c56, %c0_36] : memref<88x256xf32, #tpu.memory_space<vmem>>, vector<8x256xf32>
    tpu.vector_store %arg11[%c56, %c0_36], %35 {strides = array<i32>} : memref<88x256xf32, #tpu.memory_space<vmem>>, vector<8x256xf32>,
    %c0_37 = arith.constant 0 : index
    %c171 = arith.constant 171 : index
    %37 = vector.load %arg10[%c0_37, %c171] : memref<8x512xf32, #tpu.memory_space<vmem>>, vector<8x256xf32>
    %c64 = arith.constant 64 : index
    %c0_38 = arith.constant 0 : index
    %38 = vector.load %arg11[%c64, %c0_38] : memref<88x256xf32, #tpu.memory_space<vmem>>, vector<8x256xf32>
    tpu.vector_store %arg11[%c64, %c0_38], %37 {strides = array<i32>} : memref<88x256xf32, #tpu.memory_space<vmem>>, vector<8x256xf32>,
    %c0_39 = arith.constant 0 : index
    %c187 = arith.constant 187 : index
    %39 = vector.load %arg10[%c0_39, %c187] : memref<8x512xf32, #tpu.memory_space<vmem>>, vector<8x256xf32>
    %c72 = arith.constant 72 : index
    %c0_40 = arith.constant 0 : index
    %40 = vector.load %arg11[%c72, %c0_40] : memref<88x256xf32, #tpu.memory_space<vmem>>, vector<8x256xf32>
    tpu.vector_store %arg11[%c72, %c0_40], %39 {strides = array<i32>} : memref<88x256xf32, #tpu.memory_space<vmem>>, vector<8x256xf32>,
    %c0_41 = arith.constant 0 : index
    %c203 = arith.constant 203 : index
    %41 = vector.load %arg10[%c0_41, %c203] : memref<8x512xf32, #tpu.memory_space<vmem>>, vector<8x256xf32>
    %c80 = arith.constant 80 : index
    %c0_42 = arith.constant 0 : index
    %42 = vector.load %arg11[%c80, %c0_42] : memref<88x256xf32, #tpu.memory_space<vmem>>, vector<8x256xf32>
    tpu.vector_store %arg11[%c80, %c0_42], %41 {strides = array<i32>} : memref<88x256xf32, #tpu.memory_space<vmem>>, vector<8x256xf32>,
    %c0_43 = arith.constant 0 : index
    %c0_44 = arith.constant 0 : index
    %c0_45 = arith.constant 0 : index
    %43 = vector.load %arg7[%c0_43, %c0_44, %c0_45] : memref<1x88x88xf32, #tpu.memory_space<vmem>>, vector<1x88x88xf32>
    %44 = vector.shape_cast %43 : vector<1x88x88xf32> to vector<88x88xf32>
    %c0_46 = arith.constant 0 : index
    %c0_47 = arith.constant 0 : index
    %45 = vector.load %arg11[%c0_46, %c0_47] : memref<88x256xf32, #tpu.memory_space<vmem>>, vector<88x256xf32>
    %cst_48 = arith.constant dense<0.000000e+00> : vector<88x256xf32>
    %46 = tpu.matmul %44, %45, %cst_48 {dimension_numbers = #tpu.dot_dimension_numbers<[1], [0], [0], [1], [0, 0, 1, 1], [], []>} : vector<88x88xf32>, vector<88x256xf32>, vector<88x256xf32> -> vector<88x256xf32>
    %c0_49 = arith.constant 0 : index
    %c0_50 = arith.constant 0 : index
    %47 = vector.load %arg12[%c0_49, %c0_50] : memref<88x256xf32, #tpu.memory_space<vmem>>, vector<88x256xf32>
    tpu.vector_store %arg12[%c0_49, %c0_50], %46 {strides = array<i32>} : memref<88x256xf32, #tpu.memory_space<vmem>>, vector<88x256xf32>,
    %c0_51 = arith.constant 0 : index
    %c0_52 = arith.constant 0 : index
    %48 = vector.load %arg8[%c0_51, %c0_52] : memref<8x1xf32, #tpu.memory_space<vmem>>, vector<8x1xf32>
    %49 = vector.shape_cast %48 : vector<8x1xf32> to vector<8x1xf32>
    %50 = vector.broadcast %49 : vector<8x1xf32> to vector<8x128xf32>
    %c0_53 = arith.constant 0 : index
    %c0_54 = arith.constant 0 : index
    %c0_55 = arith.constant 0 : index
    %c0_56 = arith.constant 0 : index
    %51 = vector.load %arg9[%c0_53, %c0_54, %c0_55, %c0_56] : memref<1x1x8x128xf32, #tpu.memory_space<vmem>>, vector<1x1x8x128xf32>
    %52 = vector.shape_cast %51 : vector<1x1x8x128xf32> to vector<8x128xf32>
    %53 = vector.shape_cast %50 : vector<8x128xf32> to vector<1x1x8x128xf32>
    tpu.vector_store %arg9[%c0_53, %c0_54, %c0_55, %c0_56], %53 {strides = array<i32>} : memref<1x1x8x128xf32, #tpu.memory_space<vmem>>, vector<1x1x8x128xf32>,
    %c0_57 = arith.constant 0 : index
    %c0_58 = arith.constant 0 : index
    %c0_59 = arith.constant 0 : index
    %c0_60 = arith.constant 0 : index
    %54 = vector.load %arg9[%c0_57, %c0_58, %c0_59, %c0_60] : memref<1x1x8x128xf32, #tpu.memory_space<vmem>>, vector<1x1x8x128xf32>
    %55 = vector.shape_cast %54 : vector<1x1x8x128xf32> to vector<8x128xf32>
    %c0_61 = arith.constant 0 : index
    %c0_62 = arith.constant 0 : index
    %56 = vector.load %arg12[%c0_61, %c0_62] : memref<88x256xf32, #tpu.memory_space<vmem>>, vector<8x128xf32>
    %57 = arith.addf %55, %56 : vector<8x128xf32>
    %c0_63 = arith.constant 0 : index
    %c0_64 = arith.constant 0 : index
    %c0_65 = arith.constant 0 : index
    %c0_66 = arith.constant 0 : index
    %58 = vector.load %arg9[%c0_63, %c0_64, %c0_65, %c0_66] : memref<1x1x8x128xf32, #tpu.memory_space<vmem>>, vector<1x1x8x128xf32>
    %59 = vector.shape_cast %58 : vector<1x1x8x128xf32> to vector<8x128xf32>
    %60 = vector.shape_cast %57 : vector<8x128xf32> to vector<1x1x8x128xf32>
    tpu.vector_store %arg9[%c0_63, %c0_64, %c0_65, %c0_66], %60 {strides = array<i32>} : memref<1x1x8x128xf32, #tpu.memory_space<vmem>>, vector<1x1x8x128xf32>,
    %c0_67 = arith.constant 0 : index
    %c0_68 = arith.constant 0 : index
    %c0_69 = arith.constant 0 : index
    %c0_70 = arith.constant 0 : index
    %61 = vector.load %arg9[%c0_67, %c0_68, %c0_69, %c0_70] : memref<1x1x8x128xf32, #tpu.memory_space<vmem>>, vector<1x1x8x128xf32>
    %62 = vector.shape_cast %61 : vector<1x1x8x128xf32> to vector<8x128xf32>
    %c8_71 = arith.constant 8 : index
    %c1 = arith.constant 1 : index
    %63 = vector.load %arg12[%c8_71, %c1] : memref<88x256xf32, #tpu.memory_space<vmem>>, vector<8x128xf32>
    %64 = arith.addf %62, %63 : vector<8x128xf32>
    %c0_72 = arith.constant 0 : index
    %c0_73 = arith.constant 0 : index
    %c0_74 = arith.constant 0 : index
    %c0_75 = arith.constant 0 : index
    %65 = vector.load %arg9[%c0_72, %c0_73, %c0_74, %c0_75] : memref<1x1x8x128xf32, #tpu.memory_space<vmem>>, vector<1x1x8x128xf32>
    %66 = vector.shape_cast %65 : vector<1x1x8x128xf32> to vector<8x128xf32>
    %67 = vector.shape_cast %64 : vector<8x128xf32> to vector<1x1x8x128xf32>
    tpu.vector_store %arg9[%c0_72, %c0_73, %c0_74, %c0_75], %67 {strides = array<i32>} : memref<1x1x8x128xf32, #tpu.memory_space<vmem>>, vector<1x1x8x128xf32>,
    %c0_76 = arith.constant 0 : index
    %c0_77 = arith.constant 0 : index
    %c0_78 = arith.constant 0 : index
    %c0_79 = arith.constant 0 : index
    %68 = vector.load %arg9[%c0_76, %c0_77, %c0_78, %c0_79] : memref<1x1x8x128xf32, #tpu.memory_space<vmem>>, vector<1x1x8x128xf32>
    %69 = vector.shape_cast %68 : vector<1x1x8x128xf32> to vector<8x128xf32>
    %c16_80 = arith.constant 16 : index
    %c2 = arith.constant 2 : index
    %70 = vector.load %arg12[%c16_80, %c2] : memref<88x256xf32, #tpu.memory_space<vmem>>, vector<8x128xf32>
    %71 = arith.addf %69, %70 : vector<8x128xf32>
    %c0_81 = arith.constant 0 : index
    %c0_82 = arith.constant 0 : index
    %c0_83 = arith.constant 0 : index
    %c0_84 = arith.constant 0 : index
    %72 = vector.load %arg9[%c0_81, %c0_82, %c0_83, %c0_84] : memref<1x1x8x128xf32, #tpu.memory_space<vmem>>, vector<1x1x8x128xf32>
    %73 = vector.shape_cast %72 : vector<1x1x8x128xf32> to vector<8x128xf32>
    %74 = vector.shape_cast %71 : vector<8x128xf32> to vector<1x1x8x128xf32>
    tpu.vector_store %arg9[%c0_81, %c0_82, %c0_83, %c0_84], %74 {strides = array<i32>} : memref<1x1x8x128xf32, #tpu.memory_space<vmem>>, vector<1x1x8x128xf32>,
    %c0_85 = arith.constant 0 : index
    %c0_86 = arith.constant 0 : index
    %c0_87 = arith.constant 0 : index
    %c0_88 = arith.constant 0 : index
    %75 = vector.load %arg9[%c0_85, %c0_86, %c0_87, %c0_88] : memref<1x1x8x128xf32, #tpu.memory_space<vmem>>, vector<1x1x8x128xf32>
    %76 = vector.shape_cast %75 : vector<1x1x8x128xf32> to vector<8x128xf32>
    %c24_89 = arith.constant 24 : index
    %c3 = arith.constant 3 : index
    %77 = vector.load %arg12[%c24_89, %c3] : memref<88x256xf32, #tpu.memory_space<vmem>>, vector<8x128xf32>
    %78 = arith.addf %76, %77 : vector<8x128xf32>
    %c0_90 = arith.constant 0 : index
    %c0_91 = arith.constant 0 : index
    %c0_92 = arith.constant 0 : index
    %c0_93 = arith.constant 0 : index
    %79 = vector.load %arg9[%c0_90, %c0_91, %c0_92, %c0_93] : memref<1x1x8x128xf32, #tpu.memory_space<vmem>>, vector<1x1x8x128xf32>
    %80 = vector.shape_cast %79 : vector<1x1x8x128xf32> to vector<8x128xf32>
    %81 = vector.shape_cast %78 : vector<8x128xf32> to vector<1x1x8x128xf32>
    tpu.vector_store %arg9[%c0_90, %c0_91, %c0_92, %c0_93], %81 {strides = array<i32>} : memref<1x1x8x128xf32, #tpu.memory_space<vmem>>, vector<1x1x8x128xf32>,
    %c0_94 = arith.constant 0 : index
    %c0_95 = arith.constant 0 : index
    %c0_96 = arith.constant 0 : index
    %c0_97 = arith.constant 0 : index
    %82 = vector.load %arg9[%c0_94, %c0_95, %c0_96, %c0_97] : memref<1x1x8x128xf32, #tpu.memory_space<vmem>>, vector<1x1x8x128xf32>
    %83 = vector.shape_cast %82 : vector<1x1x8x128xf32> to vector<8x128xf32>
    %c32_98 = arith.constant 32 : index
    %c4 = arith.constant 4 : index
    %84 = vector.load %arg12[%c32_98, %c4] : memref<88x256xf32, #tpu.memory_space<vmem>>, vector<8x128xf32>
    %85 = arith.addf %83, %84 : vector<8x128xf32>
    %c0_99 = arith.constant 0 : index
    %c0_100 = arith.constant 0 : index
    %c0_101 = arith.constant 0 : index
    %c0_102 = arith.constant 0 : index
    %86 = vector.load %arg9[%c0_99, %c0_100, %c0_101, %c0_102] : memref<1x1x8x128xf32, #tpu.memory_space<vmem>>, vector<1x1x8x128xf32>
    %87 = vector.shape_cast %86 : vector<1x1x8x128xf32> to vector<8x128xf32>
    %88 = vector.shape_cast %85 : vector<8x128xf32> to vector<1x1x8x128xf32>
    tpu.vector_store %arg9[%c0_99, %c0_100, %c0_101, %c0_102], %88 {strides = array<i32>} : memref<1x1x8x128xf32, #tpu.memory_space<vmem>>, vector<1x1x8x128xf32>,
    %c0_103 = arith.constant 0 : index
    %c0_104 = arith.constant 0 : index
    %c0_105 = arith.constant 0 : index
    %c0_106 = arith.constant 0 : index
    %89 = vector.load %arg9[%c0_103, %c0_104, %c0_105, %c0_106] : memref<1x1x8x128xf32, #tpu.memory_space<vmem>>, vector<1x1x8x128xf32>
    %90 = vector.shape_cast %89 : vector<1x1x8x128xf32> to vector<8x128xf32>
    %c40_107 = arith.constant 40 : index
    %c5 = arith.constant 5 : index
    %91 = vector.load %arg12[%c40_107, %c5] : memref<88x256xf32, #tpu.memory_space<vmem>>, vector<8x128xf32>
    %92 = arith.addf %90, %91 : vector<8x128xf32>
    %c0_108 = arith.constant 0 : index
    %c0_109 = arith.constant 0 : index
    %c0_110 = arith.constant 0 : index
    %c0_111 = arith.constant 0 : index
    %93 = vector.load %arg9[%c0_108, %c0_109, %c0_110, %c0_111] : memref<1x1x8x128xf32, #tpu.memory_space<vmem>>, vector<1x1x8x128xf32>
    %94 = vector.shape_cast %93 : vector<1x1x8x128xf32> to vector<8x128xf32>
    %95 = vector.shape_cast %92 : vector<8x128xf32> to vector<1x1x8x128xf32>
    tpu.vector_store %arg9[%c0_108, %c0_109, %c0_110, %c0_111], %95 {strides = array<i32>} : memref<1x1x8x128xf32, #tpu.memory_space<vmem>>, vector<1x1x8x128xf32>,
    %c0_112 = arith.constant 0 : index
    %c0_113 = arith.constant 0 : index
    %c0_114 = arith.constant 0 : index
    %c0_115 = arith.constant 0 : index
    %96 = vector.load %arg9[%c0_112, %c0_113, %c0_114, %c0_115] : memref<1x1x8x128xf32, #tpu.memory_space<vmem>>, vector<1x1x8x128xf32>
    %97 = vector.shape_cast %96 : vector<1x1x8x128xf32> to vector<8x128xf32>
    %c48_116 = arith.constant 48 : index
    %c6 = arith.constant 6 : index
    %98 = vector.load %arg12[%c48_116, %c6] : memref<88x256xf32, #tpu.memory_space<vmem>>, vector<8x128xf32>
    %99 = arith.addf %97, %98 : vector<8x128xf32>
    %c0_117 = arith.constant 0 : index
    %c0_118 = arith.constant 0 : index
    %c0_119 = arith.constant 0 : index
    %c0_120 = arith.constant 0 : index
    %100 = vector.load %arg9[%c0_117, %c0_118, %c0_119, %c0_120] : memref<1x1x8x128xf32, #tpu.memory_space<vmem>>, vector<1x1x8x128xf32>
    %101 = vector.shape_cast %100 : vector<1x1x8x128xf32> to vector<8x128xf32>
    %102 = vector.shape_cast %99 : vector<8x128xf32> to vector<1x1x8x128xf32>
    tpu.vector_store %arg9[%c0_117, %c0_118, %c0_119, %c0_120], %102 {strides = array<i32>} : memref<1x1x8x128xf32, #tpu.memory_space<vmem>>, vector<1x1x8x128xf32>,
    %c0_121 = arith.constant 0 : index
    %c0_122 = arith.constant 0 : index
    %c0_123 = arith.constant 0 : index
    %c0_124 = arith.constant 0 : index
    %103 = vector.load %arg9[%c0_121, %c0_122, %c0_123, %c0_124] : memref<1x1x8x128xf32, #tpu.memory_space<vmem>>, vector<1x1x8x128xf32>
    %104 = vector.shape_cast %103 : vector<1x1x8x128xf32> to vector<8x128xf32>
    %c56_125 = arith.constant 56 : index
    %c7 = arith.constant 7 : index
    %105 = vector.load %arg12[%c56_125, %c7] : memref<88x256xf32, #tpu.memory_space<vmem>>, vector<8x128xf32>
    %106 = arith.addf %104, %105 : vector<8x128xf32>
    %c0_126 = arith.constant 0 : index
    %c0_127 = arith.constant 0 : index
    %c0_128 = arith.constant 0 : index
    %c0_129 = arith.constant 0 : index
    %107 = vector.load %arg9[%c0_126, %c0_127, %c0_128, %c0_129] : memref<1x1x8x128xf32, #tpu.memory_space<vmem>>, vector<1x1x8x128xf32>
    %108 = vector.shape_cast %107 : vector<1x1x8x128xf32> to vector<8x128xf32>
    %109 = vector.shape_cast %106 : vector<8x128xf32> to vector<1x1x8x128xf32>
    tpu.vector_store %arg9[%c0_126, %c0_127, %c0_128, %c0_129], %109 {strides = array<i32>} : memref<1x1x8x128xf32, #tpu.memory_space<vmem>>, vector<1x1x8x128xf32>,
    %c0_130 = arith.constant 0 : index
    %c0_131 = arith.constant 0 : index
    %c0_132 = arith.constant 0 : index
    %c0_133 = arith.constant 0 : index
    %110 = vector.load %arg9[%c0_130, %c0_131, %c0_132, %c0_133] : memref<1x1x8x128xf32, #tpu.memory_space<vmem>>, vector<1x1x8x128xf32>
    %111 = vector.shape_cast %110 : vector<1x1x8x128xf32> to vector<8x128xf32>
    %c64_134 = arith.constant 64 : index
    %c8_135 = arith.constant 8 : index
    %112 = vector.load %arg12[%c64_134, %c8_135] : memref<88x256xf32, #tpu.memory_space<vmem>>, vector<8x128xf32>
    %113 = arith.addf %111, %112 : vector<8x128xf32>
    %c0_136 = arith.constant 0 : index
    %c0_137 = arith.constant 0 : index
    %c0_138 = arith.constant 0 : index
    %c0_139 = arith.constant 0 : index
    %114 = vector.load %arg9[%c0_136, %c0_137, %c0_138, %c0_139] : memref<1x1x8x128xf32, #tpu.memory_space<vmem>>, vector<1x1x8x128xf32>
    %115 = vector.shape_cast %114 : vector<1x1x8x128xf32> to vector<8x128xf32>
    %116 = vector.shape_cast %113 : vector<8x128xf32> to vector<1x1x8x128xf32>
    tpu.vector_store %arg9[%c0_136, %c0_137, %c0_138, %c0_139], %116 {strides = array<i32>} : memref<1x1x8x128xf32, #tpu.memory_space<vmem>>, vector<1x1x8x128xf32>,
    %c0_140 = arith.constant 0 : index
    %c0_141 = arith.constant 0 : index
    %c0_142 = arith.constant 0 : index
    %c0_143 = arith.constant 0 : index
    %117 = vector.load %arg9[%c0_140, %c0_141, %c0_142, %c0_143] : memref<1x1x8x128xf32, #tpu.memory_space<vmem>>, vector<1x1x8x128xf32>
    %118 = vector.shape_cast %117 : vector<1x1x8x128xf32> to vector<8x128xf32>
    %c72_144 = arith.constant 72 : index
    %c9 = arith.constant 9 : index
    %119 = vector.load %arg12[%c72_144, %c9] : memref<88x256xf32, #tpu.memory_space<vmem>>, vector<8x128xf32>
    %120 = arith.addf %118, %119 : vector<8x128xf32>
    %c0_145 = arith.constant 0 : index
    %c0_146 = arith.constant 0 : index
    %c0_147 = arith.constant 0 : index
    %c0_148 = arith.constant 0 : index
    %121 = vector.load %arg9[%c0_145, %c0_146, %c0_147, %c0_148] : memref<1x1x8x128xf32, #tpu.memory_space<vmem>>, vector<1x1x8x128xf32>
    %122 = vector.shape_cast %121 : vector<1x1x8x128xf32> to vector<8x128xf32>
    %123 = vector.shape_cast %120 : vector<8x128xf32> to vector<1x1x8x128xf32>
    tpu.vector_store %arg9[%c0_145, %c0_146, %c0_147, %c0_148], %123 {strides = array<i32>} : memref<1x1x8x128xf32, #tpu.memory_space<vmem>>, vector<1x1x8x128xf32>,
    %c0_149 = arith.constant 0 : index
    %c0_150 = arith.constant 0 : index
    %c0_151 = arith.constant 0 : index
    %c0_152 = arith.constant 0 : index
    %124 = vector.load %arg9[%c0_149, %c0_150, %c0_151, %c0_152] : memref<1x1x8x128xf32, #tpu.memory_space<vmem>>, vector<1x1x8x128xf32>
    %125 = vector.shape_cast %124 : vector<1x1x8x128xf32> to vector<8x128xf32>
    %c80_153 = arith.constant 80 : index
    %c10 = arith.constant 10 : index
    %126 = vector.load %arg12[%c80_153, %c10] : memref<88x256xf32, #tpu.memory_space<vmem>>, vector<8x128xf32>
    %127 = arith.addf %125, %126 : vector<8x128xf32>
    %c0_154 = arith.constant 0 : index
    %c0_155 = arith.constant 0 : index
    %c0_156 = arith.constant 0 : index
    %c0_157 = arith.constant 0 : index
    %128 = vector.load %arg9[%c0_154, %c0_155, %c0_156, %c0_157] : memref<1x1x8x128xf32, #tpu.memory_space<vmem>>, vector<1x1x8x128xf32>
    %129 = vector.shape_cast %128 : vector<1x1x8x128xf32> to vector<8x128xf32>
    %130 = vector.shape_cast %127 : vector<8x128xf32> to vector<1x1x8x128xf32>
    tpu.vector_store %arg9[%c0_154, %c0_155, %c0_156, %c0_157], %130 {strides = array<i32>} : memref<1x1x8x128xf32, #tpu.memory_space<vmem>>, vector<1x1x8x128xf32>,
    %c0_158 = arith.constant 0 : index
    %c0_159 = arith.constant 0 : index
    %c0_160 = arith.constant 0 : index
    %c0_161 = arith.constant 0 : index
    %131 = vector.load %arg9[%c0_158, %c0_159, %c0_160, %c0_161] : memref<1x1x8x128xf32, #tpu.memory_space<vmem>>, vector<1x1x8x128xf32>
    %132 = vector.shape_cast %131 : vector<1x1x8x128xf32> to vector<8x128xf32>
    %cst_162 = arith.constant 0.000000e+00 : f32
    %133 = vector.broadcast %cst_162 : f32 to vector<8x128xf32>
    %134 = arith.maximumf %132, %133 : vector<8x128xf32>
    %c0_163 = arith.constant 0 : index
    %c0_164 = arith.constant 0 : index
    %c0_165 = arith.constant 0 : index
    %c0_166 = arith.constant 0 : index
    %135 = vector.load %arg9[%c0_163, %c0_164, %c0_165, %c0_166] : memref<1x1x8x128xf32, #tpu.memory_space<vmem>>, vector<1x1x8x128xf32>
    %136 = vector.shape_cast %135 : vector<1x1x8x128xf32> to vector<8x128xf32>
    %137 = vector.shape_cast %134 : vector<8x128xf32> to vector<1x1x8x128xf32>
    tpu.vector_store %arg9[%c0_163, %c0_164, %c0_165, %c0_166], %137 {strides = array<i32>} : memref<1x1x8x128xf32, #tpu.memory_space<vmem>>, vector<1x1x8x128xf32>,
    return
  }
  func.func @transform_0(%arg0: i32, %arg1: i32) -> (i32, i32, i32) {
    %c0_i32 = arith.constant 0 : i32
    %c0_i32_0 = arith.constant 0 : i32
    %c0_i32_1 = arith.constant 0 : i32
    return %arg0, %c0_i32, %c0_i32_0 : i32, i32, i32
  }
  func.func @transform_1(%arg0: i32, %arg1: i32) -> (i32, i32, i32, i32) {
    %c0_i32 = arith.constant 0 : i32
    %c0_i32_0 = arith.constant 0 : i32
    %c0_i32_1 = arith.constant 0 : i32
    return %arg0, %arg1, %c0_i32, %c0_i32_0 : i32, i32, i32, i32
  }
  func.func @transform_2(%arg0: i32, %arg1: i32) -> (i32, i32, i32) {
    %c0_i32 = arith.constant 0 : i32
    %c0_i32_0 = arith.constant 0 : i32
    %c0_i32_1 = arith.constant 0 : i32
    return %arg1, %c0_i32, %c0_i32_0 : i32, i32, i32
  }
  func.func @transform_3(%arg0: i32, %arg1: i32) -> (i32, i32) {
    %c0_i32 = arith.constant 0 : i32
    %c0_i32_0 = arith.constant 0 : i32
    %c0_i32_1 = arith.constant 0 : i32
    return %c0_i32, %c0_i32_0 : i32, i32
  }
  func.func @transform_4(%arg0: i32, %arg1: i32) -> (i32, i32) {
    %c0_i32 = arith.constant 0 : i32
    %c0_i32_0 = arith.constant 0 : i32
    %c0_i32_1 = arith.constant 0 : i32
    return %c0_i32, %c0_i32_0 : i32, i32
  }
  func.func @transform_5(%arg0: i32, %arg1: i32) -> (i32, i32, i32) {
    %c0_i32 = arith.constant 0 : i32
    %c0_i32_0 = arith.constant 0 : i32
    %c0_i32_1 = arith.constant 0 : i32
    return %arg1, %c0_i32, %c0_i32_0 : i32, i32, i32
  }
  func.func @transform_6(%arg0: i32, %arg1: i32) -> (i32, i32) {
    %c0_i32 = arith.constant 0 : i32
    %c0_i32_0 = arith.constant 0 : i32
    %c0_i32_1 = arith.constant 0 : i32
    return %c0_i32, %c0_i32_0 : i32, i32
  }
  func.func @transform_7(%arg0: i32, %arg1: i32) -> (i32, i32, i32, i32) {
    %c0_i32 = arith.constant 0 : i32
    %c0_i32_0 = arith.constant 0 : i32
    %c0_i32_1 = arith.constant 0 : i32
    return %arg0, %arg1, %c0_i32, %c0_i32_0 : i32, i32, i32, i32
  }
}

</mosaic_0001>

<llo_original>
// kernel: tpu_custom_call.1
$region0: #{tpu_custom_call.1}
  #allocation0 [shape = 'u32[]', space=smem, size = 0x4, offset = 0x4, fixed_abs, tag = 'smem constant byte address 0x4 - core index']
  #allocation1 [shape = 'u32[72,128]{1,0:T(1,128)}', space=vmem, size = 0x9000, scoped, tag = 'internal scratch']
  #allocation2 [shape = 'f32[8,512]{1,0:T(8,128)}', space=vmem, size = 0x4000, scoped, tag = 'scratch operand']
  #allocation3 [shape = 'f32[88,256]{1,0:T(8,128)}', space=vmem, size = 0x16000, scoped, tag = 'scratch operand']
  #allocation4 [shape = 'f32[88,256]{1,0:T(8,128)}', space=vmem, size = 0x16000, scoped, tag = 'scratch operand']
  %s0 = inlined_call_operand.vmem [shape: f32[2,4,128], index: 0, kind: input, shape index: {}]
  %s1 = inlined_call_operand.hbm [shape: f32[2,4,4,128], index: 1, kind: input, shape index: {}]
  %s2 = inlined_call_operand.hbm [shape: f32[4,4,4], index: 2, kind: input, shape index: {}]
  %s3 = inlined_call_operand.vmem [shape: f32[4,1], index: 3, kind: input, shape index: {}]
  %s4 = inlined_call_operand.vmem [shape: f32[1,128], index: 4, kind: input, shape index: {}]
  %s5 = inlined_call_operand.hbm [shape: f32[4,88,88], index: 5, kind: input, shape index: {}]
  %s6 = inlined_call_operand.vmem [shape: f32[8,1], index: 6, kind: input, shape index: {}]
  %s7 = inlined_call_operand.hbm [shape: f32[2,4,8,128], index: 7, kind: output, shape index: {}]
  %s8 = sld [smem:[#allocation0]]
  $region73: #{tpu_custom_call.1} parent=0
    _
  %s10 = ssub.s32 1, %s8
  %s11 = scalar_select 0, %s10, %s8
  $region1: #{tpu_custom_call.1} parent=0
    #allocation5 [shape = 'u8[4096]{0}', space=vmem, size = 0x1000, scoped, tag = 'input window, operand 1']
    #allocation6 [shape = 's32[2]{0}', space=sflag, size = 0x8, scoped, tag = 'scoped memory for tpu_custom_call.1']
    #allocation7 [shape = 's32[2]{0}', space=sflag, size = 0x8, scoped, tag = 'scoped memory for tpu_custom_call.1']
    #allocation8 [shape = 'u8[4096]{0}', space=vmem, size = 0x1000, scoped, tag = 'input window, operand 2']
    #allocation9 [shape = 's32[2]{0}', space=sflag, size = 0x8, scoped, tag = 'scoped memory for tpu_custom_call.1']
    #allocation10 [shape = 'u8[90112]{0}', space=vmem, size = 0x16000, scoped, tag = 'input window, operand 5']
    #allocation11 [shape = 'u8[8192]{0}', space=vmem, size = 0x2000, scoped, tag = 'output window, operand 0']
    %12 = vsyncpa [#allocation6], 0
    %s13 = scalar_lea.sflag [#allocation6], 1
    %14 = vsyncpa %s13, 0
    %15 = vsyncpa [#allocation9], 0
    %s16 = scalar_lea.sflag [#allocation9], 1
    %17 = vsyncpa %s16, 0
    %18 = vsyncpa [#allocation7], 0
    %s19 = scalar_lea.sflag [#allocation7], 1
    %20 = vsyncpa %s19, 0
    loop: start=0, step=1, limit=10
    $region2: #{tpu_custom_call.1} parent=1 // loop_pre_header
      _
    $region3: #{tpu_custom_call.1} parent=1 // loop_header
      %s22 = sphi 0, %s26
      %p23 = scmp.ge.s32.totalorder %s22, 10
      %s29 = sphi 0, %s41
      %s30 = sphi 0, %s37
      %s31 = sphi 0, %s29
      %s32 = sphi 0, %s30
      %s33 = sphi 0, %s31
      %s34 = sphi 0, %s32
      %s44 = sphi 0, %s46
      %s47 = sphi 0, %s44
      %s48 = sphi 0, %s47
      %s64 = sphi 0, %s48
      %s72 = sphi 0, %s74
      %s75 = sphi 0, %s72
      %s76 = sphi 0, %s75
      %s92 = sphi 0, %s76
      %s98 = sphi 0, %s100
      %s101 = sphi 0, %s98
      %s102 = sphi 0, %s101
      %s118 = sphi 0, %s102
      %s122 = sphi 0, %s122
      %s124 = sphi 0, %s122
      %s125 = sphi 0, %s124
      %s139 = sphi 0, %s125
      %s143 = sphi 0, %s143
      %s145 = sphi 0, %s143
      %s146 = sphi 0, %s145
      %s160 = sphi 0, %s146
      %s166 = sphi 0, %s168
      %s169 = sphi 0, %s166
      %s170 = sphi 0, %s169
      %s186 = sphi 0, %s170
      %s190 = sphi 0, %s190
      %s192 = sphi 0, %s190
      %s193 = sphi 0, %s192
      %s207 = sphi 0, %s193
      %s215 = sphi 0, %s217
      %s218 = sphi 0, %s215
      %s219 = sphi 0, %s218
      %s235 = sphi 0, %s219
    $region4: #{tpu_custom_call.1} parent=1 // loop_header_branch
      %25 = sbr.rel (%p23) target = $region8
    $region5: #{tpu_custom_call.1} parent=1 // loop_body
      %s27 = ssub.s32 %s22, 1
      %s28 = ssub.s32 %s22, 2
      %s35 = sadd.s32 1, %s30
      %p36 = scmp.ge.s32.totalorder %s35, 4
      %s37 = scalar_select %p36, 0, %s35
      %s38 = sadd.s32 1, %s29
      %s39 = scalar_select %p36, %s38, %s29
      %p40 = scmp.ge.s32.totalorder %s39, 2
      %s41 = scalar_select %p40, 0, %s39
      %s42 = ssub.s32 %s29, %s41
      %p43 = scmp.eq.s32.totalorder %s42, 0
      %s45 = sadd.s32 %s44, 1
      %s46 = scalar_select %p43, %s44, %s45
      %p49 = pneg %p43
      %p50 = scmp.eq.s32.totalorder %s22, 7
      %p51 = por %p49, %p50
      %p52 = scmp.ne.s32.totalorder %s44, %s47
      %p53 = scmp.eq.s32.totalorder %s22, 0
      %p54 = por %p52, %p53
      %p55 = scmp.ne.s32.totalorder %s44, %s47
      %p56 = scmp.eq.s32.totalorder %s27, 7
      %p57 = por %p55, %p56
      %p58 = scmp.ne.s32.totalorder %s47, %s48
      %p59 = scmp.eq.s32.totalorder %s27, 0
      %p60 = por %p58, %p59
      %p61 = scmp.ne.s32.totalorder %s47, %s48
      %p62 = scmp.eq.s32.totalorder %s28, 7
      %p63 = por %p61, %p62
      %p65 = scmp.ne.s32.totalorder %s48, %s64
      %p66 = scmp.eq.s32.totalorder %s28, 0
      %p67 = por %p65, %p66
      %s68 = ssub.s32 %s29, %s41
      %s69 = ssub.s32 %s30, %s37
      %s70 = sor.u32 %s68, %s69
      %p71 = scmp.eq.s32.totalorder %s70, 0
      %s73 = sadd.s32 %s72, 1
      %s74 = scalar_select %p71, %s72, %s73
      %p77 = pneg %p71
      %p78 = scmp.eq.s32.totalorder %s22, 7
      %p79 = por %p77, %p78
      %p80 = scmp.ne.s32.totalorder %s72, %s75
      %p81 = scmp.eq.s32.totalorder %s22, 0
      %p82 = por %p80, %p81
      %p83 = scmp.ne.s32.totalorder %s72, %s75
      %p84 = scmp.eq.s32.totalorder %s27, 7
      %p85 = por %p83, %p84
      %p86 = scmp.ne.s32.totalorder %s75, %s76
      %p87 = scmp.eq.s32.totalorder %s27, 0
      %p88 = por %p86, %p87
      %p89 = scmp.ne.s32.totalorder %s75, %s76
      %p90 = scmp.eq.s32.totalorder %s28, 7
      %p91 = por %p89, %p90
      %p93 = scmp.ne.s32.totalorder %s76, %s92
      %p94 = scmp.eq.s32.totalorder %s28, 0
      %p95 = por %p93, %p94
      %s96 = ssub.s32 %s30, %s37
      %p97 = scmp.eq.s32.totalorder %s96, 0
      %s99 = sadd.s32 %s98, 1
      %s100 = scalar_select %p97, %s98, %s99
      %p103 = pneg %p97
      %p104 = scmp.eq.s32.totalorder %s22, 7
      %p105 = por %p103, %p104
      %p106 = scmp.ne.s32.totalorder %s98, %s101
      %p107 = scmp.eq.s32.totalorder %s22, 0
      %p108 = por %p106, %p107
      %p109 = scmp.ne.s32.totalorder %s98, %s101
      %p110 = scmp.eq.s32.totalorder %s27, 7
      %p111 = por %p109, %p110
      %p112 = scmp.ne.s32.totalorder %s101, %s102
      %p113 = scmp.eq.s32.totalorder %s27, 0
      %p114 = por %p112, %p113
      %p115 = scmp.ne.s32.totalorder %s101, %s102
      %p116 = scmp.eq.s32.totalorder %s28, 7
      %p117 = por %p115, %p116
      %p119 = scmp.ne.s32.totalorder %s102, %s118
      %p120 = scmp.eq.s32.totalorder %s28, 0
      %p121 = por %p119, %p120
      %s123 = sadd.s32 %s122, 1
      %p126 = scmp.eq.s32.totalorder %s22, 7
      %p127 = scmp.ne.s32.totalorder %s122, %s124
      %p128 = scmp.eq.s32.totalorder %s22, 0
      %p129 = por %p127, %p128
      %p130 = scmp.ne.s32.totalorder %s122, %s124
      %p131 = scmp.eq.s32.totalorder %s27, 7
      %p132 = por %p130, %p131
      %p133 = scmp.ne.s32.totalorder %s124, %s125
      %p134 = scmp.eq.s32.totalorder %s27, 0
      %p135 = por %p133, %p134
      %p136 = scmp.ne.s32.totalorder %s124, %s125
      %p137 = scmp.eq.s32.totalorder %s28, 7
      %p138 = por %p136, %p137
      %p140 = scmp.ne.s32.totalorder %s125, %s139
      %p141 = scmp.eq.s32.totalorder %s28, 0
      %p142 = por %p140, %p141
      %s144 = sadd.s32 %s143, 1
      %p147 = scmp.eq.s32.totalorder %s22, 7
      %p148 = scmp.ne.s32.totalorder %s143, %s145
      %p149 = scmp.eq.s32.totalorder %s22, 0
      %p150 = por %p148, %p149
      %p151 = scmp.ne.s32.totalorder %s143, %s145
      %p152 = scmp.eq.s32.totalorder %s27, 7
      %p153 = por %p151, %p152
      %p154 = scmp.ne.s32.totalorder %s145, %s146
      %p155 = scmp.eq.s32.totalorder %s27, 0
      %p156 = por %p154, %p155
      %p157 = scmp.ne.s32.totalorder %s145, %s146
      %p158 = scmp.eq.s32.totalorder %s28, 7
      %p159 = por %p157, %p158
      %p161 = scmp.ne.s32.totalorder %s146, %s160
      %p162 = scmp.eq.s32.totalorder %s28, 0
      %p163 = por %p161, %p162
      %s164 = ssub.s32 %s30, %s37
      %p165 = scmp.eq.s32.totalorder %s164, 0
      %s167 = sadd.s32 %s166, 1
      %s168 = scalar_select %p165, %s166, %s167
      %p171 = pneg %p165
      %p172 = scmp.eq.s32.totalorder %s22, 7
      %p173 = por %p171, %p172
      %p174 = scmp.ne.s32.totalorder %s166, %s169
      %p175 = scmp.eq.s32.totalorder %s22, 0
      %p176 = por %p174, %p175
      %p177 = scmp.ne.s32.totalorder %s166, %s169
      %p178 = scmp.eq.s32.totalorder %s27, 7
      %p179 = por %p177, %p178
      %p180 = scmp.ne.s32.totalorder %s169, %s170
      %p181 = scmp.eq.s32.totalorder %s27, 0
      %p182 = por %p180, %p181
      %p183 = scmp.ne.s32.totalorder %s169, %s170
      %p184 = scmp.eq.s32.totalorder %s28, 7
      %p185 = por %p183, %p184
      %p187 = scmp.ne.s32.totalorder %s170, %s186
      %p188 = scmp.eq.s32.totalorder %s28, 0
      %p189 = por %p187, %p188
      %s191 = sadd.s32 %s190, 1
      %p194 = scmp.eq.s32.totalorder %s22, 7
      %p195 = scmp.ne.s32.totalorder %s190, %s192
      %p196 = scmp.eq.s32.totalorder %s22, 0
      %p197 = por %p195, %p196
      %p198 = scmp.ne.s32.totalorder %s190, %s192
      %p199 = scmp.eq.s32.totalorder %s27, 7
      %p200 = por %p198, %p199
      %p201 = scmp.ne.s32.totalorder %s192, %s193
      %p202 = scmp.eq.s32.totalorder %s27, 0
      %p203 = por %p201, %p202
      %p204 = scmp.ne.s32.totalorder %s192, %s193
      %p205 = scmp.eq.s32.totalorder %s28, 7
      %p206 = por %p204, %p205
      %p208 = scmp.ne.s32.totalorder %s193, %s207
      %p209 = scmp.eq.s32.totalorder %s28, 0
      %p210 = por %p208, %p209
      %s211 = ssub.s32 %s29, %s41
      %s212 = ssub.s32 %s30, %s37
      %s213 = sor.u32 %s211, %s212
      %p214 = scmp.eq.s32.totalorder %s213, 0
      %s216 = sadd.s32 %s215, 1
      %s217 = scalar_select %p214, %s215, %s216
      %p220 = pneg %p214
      %p221 = scmp.eq.s32.totalorder %s22, 7
      %p222 = por %p220, %p221
      %p223 = scmp.ne.s32.totalorder %s215, %s218
      %p224 = scmp.eq.s32.totalorder %s22, 0
      %p225 = por %p223, %p224
      %p226 = scmp.ne.s32.totalorder %s215, %s218
      %p227 = scmp.eq.s32.totalorder %s27, 7
      %p228 = por %p226, %p227
      %p229 = scmp.ne.s32.totalorder %s218, %s219
      %p230 = scmp.eq.s32.totalorder %s27, 0
      %p231 = por %p229, %p230
      %p232 = scmp.ne.s32.totalorder %s218, %s219
      %p233 = scmp.eq.s32.totalorder %s28, 7
      %p234 = por %p232, %p233
      %p236 = scmp.ne.s32.totalorder %s219, %s235
      %p237 = scmp.eq.s32.totalorder %s28, 0
      %p238 = por %p236, %p237
      %p239 = scmp.le.s32.totalorder 1, %s22
      %p240 = scmp.lt.s32.totalorder %s22, 9
      %p241 = pnand %p239, %p240
      %p242 = pneg %p241
      // Predicated region
      $region9: #{tpu_custom_call.1} parent=5 // pred_check
        _
      $region10: #{tpu_custom_call.1} parent=5 // pred_check_branch
        %244 = sbr.rel (%p241) target = $region12
      $region11: #{tpu_custom_call.1} parent=5 // pred_region
        %s245 = ssub.s32 %s22, 1
        // Predicated region
        $region13: #{tpu_custom_call.1} parent=11 // pred_check
          %p246 = pneg %p135
        $region14: #{tpu_custom_call.1} parent=11 // pred_check_branch
          %248 = sbr.rel (%p246) target = $region16
        $region15: #{tpu_custom_call.1} parent=11 // pred_region
          _
        $region16: #{tpu_custom_call.1} parent=11 // pred_fallthru
          _
        // Predicated region
        $region17: #{tpu_custom_call.1} parent=11 // pred_check
          %p249 = pneg %p156
        $region18: #{tpu_custom_call.1} parent=11 // pred_check_branch
          %251 = sbr.rel (%p249) target = $region20
        $region19: #{tpu_custom_call.1} parent=11 // pred_region
          _
        $region20: #{tpu_custom_call.1} parent=11 // pred_fallthru
          _
        // Predicated region
        $region21: #{tpu_custom_call.1} parent=11 // pred_check
          %p252 = pneg %p203
        $region22: #{tpu_custom_call.1} parent=11 // pred_check_branch
          %254 = sbr.rel (%p252) target = $region24
        $region23: #{tpu_custom_call.1} parent=11 // pred_region
          _
        $region24: #{tpu_custom_call.1} parent=11 // pred_fallthru
          _
      $region12: #{tpu_custom_call.1} parent=5 // pred_fallthru
        _
      %p255 = scmp.lt.s32.totalorder %s22, 8
      // Predicated region
      $region25: #{tpu_custom_call.1} parent=5 // pred_check
        %p256 = pneg %p255
      $region26: #{tpu_custom_call.1} parent=5 // pred_check_branch
        %258 = sbr.rel (%p256) target = $region28
      $region27: #{tpu_custom_call.1} parent=5 // pred_region
        // Predicated region
        $region29: #{tpu_custom_call.1} parent=27 // pred_check
          %p259 = pneg %p54
        $region30: #{tpu_custom_call.1} parent=27 // pred_check_branch
          %261 = sbr.rel (%p259) target = $region32
        $region31: #{tpu_custom_call.1} parent=27 // pred_region
          %p262 = scmp.lt.s32.totalorder %s29, 1
          %s263 = scalar_select %p262, %s29, 1
          %s264 = smul.addr %s263, 4
          %s265 = scalar_lea.vmem %s0, %s264
        $region32: #{tpu_custom_call.1} parent=27 // pred_fallthru
          _
        // Predicated region
        $region33: #{tpu_custom_call.1} parent=27 // pred_check
          %p266 = pneg %p82
        $region34: #{tpu_custom_call.1} parent=27 // pred_check_branch
          %268 = sbr.rel (%p266) target = $region36
        $region35: #{tpu_custom_call.1} parent=27 // pred_region
          %s269 = sand.u32 %s72, 1
          %s270 = scalar_lea.sflag [#allocation6], %s269
          %s271 = sand.u32 %s72, 1
          %s272 = smul.addr %s271, 4
          %s273 = scalar_lea.vmem [#allocation5], %s272
          %275 = vsyncadd %s270, 0
          %s276 = smul.addr %s29, 4
          %s277 = sadd.s32 %s30, %s276
          %s278 = smul.addr %s277, 4
          %s279 = scalar_lea.hbm %s1, %s278
          %s281 = sshll.u32 %s279, 4
          %s282 = int_to_ptr.hbm [resolvable:$true] %s281
          %s283 = sshll.u32 %s273, 4
          %s284 = int_to_ptr.vmem [resolvable:$true] %s283
          %286 = dma.hbm_to_vmem [thread:$0]  %s282, 64, %s284, %s270
        $region36: #{tpu_custom_call.1} parent=27 // pred_fallthru
          _
        // Predicated region
        $region37: #{tpu_custom_call.1} parent=27 // pred_check
          %p287 = pneg %p108
        $region38: #{tpu_custom_call.1} parent=27 // pred_check_branch
          %289 = sbr.rel (%p287) target = $region40
        $region39: #{tpu_custom_call.1} parent=27 // pred_region
          %s290 = sand.u32 %s22, 1
          %s291 = scalar_lea.sflag [#allocation9], %s290
          %s292 = sand.u32 %s98, 1
          %s293 = smul.addr %s292, 4
          %s294 = scalar_lea.vmem [#allocation8], %s293
          %296 = vsyncadd %s291, 0
          %s297 = smul.addr %s30, 4
          %s298 = scalar_lea.hbm %s2, %s297
          %s300 = sshll.u32 %s298, 4
          %s301 = int_to_ptr.hbm [resolvable:$true] %s300
          %s302 = sshll.u32 %s294, 4
          %s303 = int_to_ptr.vmem [resolvable:$true] %s302
          %305 = dma.hbm_to_vmem [thread:$0]  %s301, 64, %s303, %s291
        $region40: #{tpu_custom_call.1} parent=27 // pred_fallthru
          _
        // Predicated region
        $region41: #{tpu_custom_call.1} parent=27 // pred_check
          %p306 = pneg %p176
        $region42: #{tpu_custom_call.1} parent=27 // pred_check_branch
          %308 = sbr.rel (%p306) target = $region44
        $region43: #{tpu_custom_call.1} parent=27 // pred_region
          %s309 = sand.u32 %s22, 1
          %s310 = scalar_lea.sflag [#allocation9], %s309
          %s311 = sand.u32 %s166, 1
          %s312 = smul.addr %s311, 88
          %s313 = scalar_lea.vmem [#allocation10], %s312
          %315 = vsyncadd %s310, 0
          %s316 = smul.addr %s30, 11
          %s317 = smul.addr %s316, 8
          %s318 = scalar_lea.hbm %s5, %s317
          %s319 = sshll.u32 %s318, 4
          %s320 = int_to_ptr.hbm [resolvable:$true] %s319
          %s321 = sshll.u32 %s313, 4
          %s322 = int_to_ptr.vmem [resolvable:$true] %s321
          %327 = dma.hbm_to_vmem [thread:$0]  %s320, 1408, %s322, %s310, 128, 128, 8
        $region44: #{tpu_custom_call.1} parent=27 // pred_fallthru
          _
      $region28: #{tpu_custom_call.1} parent=5 // pred_fallthru
        _
      %p328 = scmp.le.s32.totalorder 1, %s22
      %p329 = scmp.lt.s32.totalorder %s22, 9
      %p330 = pnand %p328, %p329
      %p331 = pneg %p330
      // Predicated region
      $region45: #{tpu_custom_call.1} parent=5 // pred_check
        _
      $region46: #{tpu_custom_call.1} parent=5 // pred_check_branch
        %333 = sbr.rel (%p330) target = $region48
      $region47: #{tpu_custom_call.1} parent=5 // pred_region
        %s334 = ssub.s32 %s22, 1
        %s335 = sand.u32 %s75, 1
        %s336 = scalar_lea.sflag [#allocation6], %s335
        %s337 = sand.u32 %s75, 1
        %s338 = smul.addr %s337, 4
        %s339 = scalar_lea.vmem [#allocation5], %s338
        // Predicated region
        $region49: #{tpu_custom_call.1} parent=47 // pred_check
          %p340 = pneg %p88
        $region50: #{tpu_custom_call.1} parent=47 // pred_check_branch
          %342 = sbr.rel (%p340) target = $region52
        $region51: #{tpu_custom_call.1} parent=47 // pred_region
          %344 = dma.done %s336, 64
        $region52: #{tpu_custom_call.1} parent=47 // pred_fallthru
          _
        %s345 = sand.u32 %s27, 1
        %s346 = scalar_lea.sflag [#allocation9], %s345
        %s347 = sand.u32 %s101, 1
        %s348 = smul.addr %s347, 4
        %s349 = scalar_lea.vmem [#allocation8], %s348
        // Predicated region
        $region53: #{tpu_custom_call.1} parent=47 // pred_check
          %p350 = pneg %p114
        $region54: #{tpu_custom_call.1} parent=47 // pred_check_branch
          %352 = sbr.rel (%p350) target = $region56
        $region55: #{tpu_custom_call.1} parent=47 // pred_region
          %354 = dma.done %s346, 64
        $region56: #{tpu_custom_call.1} parent=47 // pred_fallthru
          _
        %s355 = sand.u32 %s27, 1
        %s356 = scalar_lea.sflag [#allocation9], %s355
        %s357 = sand.u32 %s169, 1
        %s358 = smul.addr %s357, 88
        %s359 = scalar_lea.vmem [#allocation10], %s358
        // Predicated region
        $region57: #{tpu_custom_call.1} parent=47 // pred_check
          %p360 = pneg %p182
        $region58: #{tpu_custom_call.1} parent=47 // pred_check_branch
          %362 = sbr.rel (%p360) target = $region60
        $region59: #{tpu_custom_call.1} parent=47 // pred_region
          %364 = dma.done %s356, 1408
        $region60: #{tpu_custom_call.1} parent=47 // pred_fallthru
          _
        %p365 = scmp.lt.s32.totalorder %s31, 1
        %s366 = scalar_select %p365, %s31, 1
        %s367 = smul.addr %s366, 4
        %s368 = scalar_lea.vmem %s0, %s367
        %p369 = pneg %p60
        %p370 = pneg %p57
        %s371 = sand.u32 %s75, 1
        %s372 = scalar_lea.sflag [#allocation6], %s371
        %s373 = sand.u32 %s75, 1
        %s374 = smul.addr %s373, 4
        %s375 = scalar_lea.vmem [#allocation5], %s374
        %p376 = pneg %p88
        %p377 = pneg %p85
        %s378 = sand.u32 %s27, 1
        %s379 = scalar_lea.sflag [#allocation9], %s378
        %s380 = sand.u32 %s101, 1
        %s381 = smul.addr %s380, 4
        %s382 = scalar_lea.vmem [#allocation8], %s381
        %p383 = pneg %p114
        %p384 = pneg %p111
        %p385 = pneg %p135
        %p386 = pneg %p132
        %p387 = pneg %p156
        %p388 = pneg %p153
        %s389 = sand.u32 %s27, 1
        %s390 = scalar_lea.sflag [#allocation9], %s389
        %s391 = sand.u32 %s169, 1
        %s392 = smul.addr %s391, 88
        %s393 = scalar_lea.vmem [#allocation10], %s392
        %p394 = pneg %p182
        %p395 = pneg %p179
        %p396 = pneg %p203
        %p397 = pneg %p200
        %p398 = pneg %p231
        %p399 = pneg %p228
        %s400 = sand.u32 %s218, 1
        %s401 = scalar_lea.sflag [#allocation7], %s400
        %s402 = sand.u32 %s218, 1
        %s403 = smul.addr %s402, 8
        %s404 = scalar_lea.vmem [#allocation11], %s403
        %p405 = scmp.lt.s32.totalorder %s31, 1
        %s406 = scalar_select %p405, %s31, 1
        %s407 = smul.addr %s406, 4
        %s408 = scalar_lea.vmem %s0, %s407
        %v409 = vld [vmem:[%s349] sm:$0xf]
        %v410 = vld [vmem:[%s408] sm:$0xf]
        %v411 = vld [vmem:[%s3] sm:$0xf]
        %413 = vset.pattern.permute.xlu0 0
        %414 = vperm.xlu0 %413, %v411
        %v415 = vpop.permute.xlu0 %414
        %vm417 = vcmask 31744
        %v419 = vsel %vm417, %v409, 0
        %vm421 = vcmask 1043456
        %v423 = vsel %vm421, %v410, 0
        %425 = vmatpush.msra.mxu0 0.0
        %426 = vmatpush.msra.mxu0 0.0
        %427 = vmatpush.msra.mxu0 0.0
        %428 = vmatpush.msra.mxu0 0.0
        %429 = vmatpush.msra.mxu0 0.0
        %430 = vmatpush.msra.mxu0 0.0
        %431 = vmatpush.msra.mxu0 0.0
        %432 = vmatpush.msra.mxu0 0.0
        %433 = vmatpush.msra.mxu0 0.0
        %434 = vmatpush.msra.mxu0 0.0
        %435 = vmatpush.msra.mxu0 0.0
        %436 = vmatpush.msra.mxu0 0.0
        %437 = vmatpush.msra.mxu0 0.0
        %438 = vmatpush.msra.mxu0 0.0
        %439 = vmatpush.msra.mxu0 0.0
        %440 = vmatpush.msra.mxu0 %v423
        %441 = vmatmul.f32.gmra.mxu0 %v419
        %v442 = vpop.f32.mrf.mxu0
        %v443 = vadd.f32 %v415, %v442
        %444 = vdwg.mxu0
        %v445 = vmax.f32 %v443, 0.0
        %v446 = vld [vmem:[%s4] sm:$0x1]
        %v448 = vperm.slane %v446, 0
        %v450 = vmul.f32 %v445, %v448
        %451 = vst [vmem:[#allocation2] sm:$0xff] 0.0
        %452 = vst [vmem:[#allocation2 + $0x10] sm:$0xff] 0.0
        %453 = vst [vmem:[#allocation2 + $0x18] sm:$0xff] 0.0
        %v454 = vld [vmem:[%s339] sm:$0xf]
        %v456 = vrot.slane %v450, 4
        %v458 = vsel %vm421, %v454, %v456
        %459 = vst [vmem:[#allocation2 + $0x8] sm:$0xff] %v458
        %v460 = vld [vmem:[#allocation2] sm:$0xff]
        %v461 = vld [vmem:[#allocation2 + $0x8] sm:$0xff]
        %v462 = vld [vmem:[#allocation2 + $0x10] sm:$0xff]
        %466 = vrot.lane.b32.xlu0 %v460, 85
        %v467 = vpop.permute.xlu0 %466
        %468 = vrot.lane.b32.xlu0 %v461, 85
        %v469 = vpop.permute.xlu0 %468
        %470 = vrot.lane.b32.xlu0 %v462, 85
        %v471 = vpop.permute.xlu0 %470
        %vm472 = vcmask 695296
        %v473 = vsel %vm472, %v467, %v469
        %v474 = vsel %vm472, %v469, %v471
        %477 = vst [vmem:[#allocation3] sm:$0xff] %v473
        %478 = vst [vmem:[#allocation3 + $0x8] sm:$0xff] %v474
        %v479 = vld [vmem:[#allocation2] sm:$0xff]
        %v480 = vld [vmem:[#allocation2 + $0x8] sm:$0xff]
        %v481 = vld [vmem:[#allocation2 + $0x10] sm:$0xff]
        %485 = vrot.lane.b32.xlu0 %v479, 69
        %v486 = vpop.permute.xlu0 %485
        %487 = vrot.lane.b32.xlu0 %v480, 69
        %v488 = vpop.permute.xlu0 %487
        %489 = vrot.lane.b32.xlu0 %v481, 69
        %v490 = vpop.permute.xlu0 %489
        %vm491 = vcmask 564224
        %v492 = vsel %vm491, %v486, %v488
        %v493 = vsel %vm491, %v488, %v490
        %496 = vst [vmem:[#allocation3 + $0x10] sm:$0xff] %v492
        %497 = vst [vmem:[#allocation3 + $0x18] sm:$0xff] %v493
        %v498 = vld [vmem:[#allocation2] sm:$0xff]
        %v499 = vld [vmem:[#allocation2 + $0x8] sm:$0xff]
        %v500 = vld [vmem:[#allocation2 + $0x10] sm:$0xff]
        %504 = vrot.lane.b32.xlu0 %v498, 53
        %v505 = vpop.permute.xlu0 %504
        %506 = vrot.lane.b32.xlu0 %v499, 53
        %v507 = vpop.permute.xlu0 %506
        %508 = vrot.lane.b32.xlu0 %v500, 53
        %v509 = vpop.permute.xlu0 %508
        %vm510 = vcmask 433152
        %v511 = vsel %vm510, %v505, %v507
        %v512 = vsel %vm510, %v507, %v509
        %515 = vst [vmem:[#allocation3 + $0x20] sm:$0xff] %v511
        %516 = vst [vmem:[#allocation3 + $0x28] sm:$0xff] %v512
        %v517 = vld [vmem:[#allocation2] sm:$0xff]
        %v518 = vld [vmem:[#allocation2 + $0x8] sm:$0xff]
        %v519 = vld [vmem:[#allocation2 + $0x10] sm:$0xff]
        %523 = vrot.lane.b32.xlu0 %v517, 37
        %v524 = vpop.permute.xlu0 %523
        %525 = vrot.lane.b32.xlu0 %v518, 37
        %v526 = vpop.permute.xlu0 %525
        %527 = vrot.lane.b32.xlu0 %v519, 37
        %v528 = vpop.permute.xlu0 %527
        %vm529 = vcmask 302080
        %v530 = vsel %vm529, %v524, %v526
        %v531 = vsel %vm529, %v526, %v528
        %534 = vst [vmem:[#allocation3 + $0x30] sm:$0xff] %v530
        %535 = vst [vmem:[#allocation3 + $0x38] sm:$0xff] %v531
        %v536 = vld [vmem:[#allocation2] sm:$0xff]
        %v537 = vld [vmem:[#allocation2 + $0x8] sm:$0xff]
        %v538 = vld [vmem:[#allocation2 + $0x10] sm:$0xff]
        %542 = vrot.lane.b32.xlu0 %v536, 21
        %v543 = vpop.permute.xlu0 %542
        %544 = vrot.lane.b32.xlu0 %v537, 21
        %v545 = vpop.permute.xlu0 %544
        %546 = vrot.lane.b32.xlu0 %v538, 21
        %v547 = vpop.permute.xlu0 %546
        %vm548 = vcmask 171008
        %v549 = vsel %vm548, %v543, %v545
        %v550 = vsel %vm548, %v545, %v547
        %553 = vst [vmem:[#allocation3 + $0x40] sm:$0xff] %v549
        %554 = vst [vmem:[#allocation3 + $0x48] sm:$0xff] %v550
        %v555 = vld [vmem:[#allocation2] sm:$0xff]
        %v556 = vld [vmem:[#allocation2 + $0x8] sm:$0xff]
        %v557 = vld [vmem:[#allocation2 + $0x10] sm:$0xff]
        %561 = vrot.lane.b32.xlu0 %v555, 5
        %v562 = vpop.permute.xlu0 %561
        %563 = vrot.lane.b32.xlu0 %v556, 5
        %v564 = vpop.permute.xlu0 %563
        %565 = vrot.lane.b32.xlu0 %v557, 5
        %v566 = vpop.permute.xlu0 %565
        %vm567 = vcmask 39936
        %v568 = vsel %vm567, %v562, %v564
        %v569 = vsel %vm567, %v564, %v566
        %572 = vst [vmem:[#allocation3 + $0x50] sm:$0xff] %v568
        %573 = vst [vmem:[#allocation3 + $0x58] sm:$0xff] %v569
        %v574 = vld [vmem:[#allocation2 + $0x8] sm:$0xff]
        %v575 = vld [vmem:[#allocation2 + $0x10] sm:$0xff]
        %v576 = vld [vmem:[#allocation2 + $0x18] sm:$0xff]
        %580 = vrot.lane.b32.xlu0 %v574, 117
        %v581 = vpop.permute.xlu0 %580
        %582 = vrot.lane.b32.xlu0 %v575, 117
        %v583 = vpop.permute.xlu0 %582
        %584 = vrot.lane.b32.xlu0 %v576, 117
        %v585 = vpop.permute.xlu0 %584
        %vm586 = vcmask 957440
        %v587 = vsel %vm586, %v581, %v583
        %v588 = vsel %vm586, %v583, %v585
        %591 = vst [vmem:[#allocation3 + $0x60] sm:$0xff] %v587
        %592 = vst [vmem:[#allocation3 + $0x68] sm:$0xff] %v588
        %v593 = vld [vmem:[#allocation2 + $0x8] sm:$0xff]
        %v594 = vld [vmem:[#allocation2 + $0x10] sm:$0xff]
        %v595 = vld [vmem:[#allocation2 + $0x18] sm:$0xff]
        %599 = vrot.lane.b32.xlu0 %v593, 101
        %v600 = vpop.permute.xlu0 %599
        %601 = vrot.lane.b32.xlu0 %v594, 101
        %v602 = vpop.permute.xlu0 %601
        %603 = vrot.lane.b32.xlu0 %v595, 101
        %v604 = vpop.permute.xlu0 %603
        %vm605 = vcmask 826368
        %v606 = vsel %vm605, %v600, %v602
        %v607 = vsel %vm605, %v602, %v604
        %610 = vst [vmem:[#allocation3 + $0x70] sm:$0xff] %v606
        %611 = vst [vmem:[#allocation3 + $0x78] sm:$0xff] %v607
        %v612 = vld [vmem:[#allocation2 + $0x8] sm:$0xff]
        %v613 = vld [vmem:[#allocation2 + $0x10] sm:$0xff]
        %v614 = vld [vmem:[#allocation2 + $0x18] sm:$0xff]
        %618 = vrot.lane.b32.xlu0 %v612, 85
        %v619 = vpop.permute.xlu0 %618
        %620 = vrot.lane.b32.xlu0 %v613, 85
        %v621 = vpop.permute.xlu0 %620
        %622 = vrot.lane.b32.xlu0 %v614, 85
        %v623 = vpop.permute.xlu0 %622
        %v624 = vsel %vm472, %v619, %v621
        %v625 = vsel %vm472, %v621, %v623
        %628 = vst [vmem:[#allocation3 + $0x80] sm:$0xff] %v624
        %629 = vst [vmem:[#allocation3 + $0x88] sm:$0xff] %v625
        %v630 = vld [vmem:[#allocation2 + $0x8] sm:$0xff]
        %v631 = vld [vmem:[#allocation2 + $0x10] sm:$0xff]
        %v632 = vld [vmem:[#allocation2 + $0x18] sm:$0xff]
        %636 = vrot.lane.b32.xlu0 %v630, 69
        %v637 = vpop.permute.xlu0 %636
        %638 = vrot.lane.b32.xlu0 %v631, 69
        %v639 = vpop.permute.xlu0 %638
        %640 = vrot.lane.b32.xlu0 %v632, 69
        %v641 = vpop.permute.xlu0 %640
        %v642 = vsel %vm491, %v637, %v639
        %v643 = vsel %vm491, %v639, %v641
        %646 = vst [vmem:[#allocation3 + $0x90] sm:$0xff] %v642
        %647 = vst [vmem:[#allocation3 + $0x98] sm:$0xff] %v643
        %v648 = vld [vmem:[#allocation2 + $0x8] sm:$0xff]
        %v649 = vld [vmem:[#allocation2 + $0x10] sm:$0xff]
        %v650 = vld [vmem:[#allocation2 + $0x18] sm:$0xff]
        %654 = vrot.lane.b32.xlu0 %v648, 53
        %v655 = vpop.permute.xlu0 %654
        %656 = vrot.lane.b32.xlu0 %v649, 53
        %v657 = vpop.permute.xlu0 %656
        %658 = vrot.lane.b32.xlu0 %v650, 53
        %v659 = vpop.permute.xlu0 %658
        %v660 = vsel %vm510, %v655, %v657
        %v661 = vsel %vm510, %v657, %v659
        %664 = vst [vmem:[#allocation3 + $0xa0] sm:$0xff] %v660
        %665 = vst [vmem:[#allocation3 + $0xa8] sm:$0xff] %v661
        %v666 = vld [vmem:[%s359] sm:$0xff]
        %v667 = vld [vmem:[%s359 + $0x8] sm:$0xff]
        %v668 = vld [vmem:[%s359 + $0x10] sm:$0xff]
        %v669 = vld [vmem:[%s359 + $0x18] sm:$0xff]
        %v670 = vld [vmem:[%s359 + $0x20] sm:$0xff]
        %v671 = vld [vmem:[%s359 + $0x28] sm:$0xff]
        %v672 = vld [vmem:[%s359 + $0x30] sm:$0xff]
        %v673 = vld [vmem:[%s359 + $0x38] sm:$0xff]
        %v674 = vld [vmem:[%s359 + $0x40] sm:$0xff]
        %v675 = vld [vmem:[%s359 + $0x48] sm:$0xff]
        %v676 = vld [vmem:[%s359 + $0x50] sm:$0xff]
        %v677 = vld [vmem:[#allocation3] sm:$0xff]
        %v678 = vld [vmem:[#allocation3 + $0x8] sm:$0xff]
        %v679 = vld [vmem:[#allocation3 + $0x10] sm:$0xff]
        %v680 = vld [vmem:[#allocation3 + $0x18] sm:$0xff]
        %v681 = vld [vmem:[#allocation3 + $0x20] sm:$0xff]
        %v682 = vld [vmem:[#allocation3 + $0x28] sm:$0xff]
        %v683 = vld [vmem:[#allocation3 + $0x30] sm:$0xff]
        %v684 = vld [vmem:[#allocation3 + $0x38] sm:$0xff]
        %v685 = vld [vmem:[#allocation3 + $0x40] sm:$0xff]
        %v686 = vld [vmem:[#allocation3 + $0x48] sm:$0xff]
        %v687 = vld [vmem:[#allocation3 + $0x50] sm:$0xff]
        %v688 = vld [vmem:[#allocation3 + $0x58] sm:$0xff]
        %v689 = vld [vmem:[#allocation3 + $0x60] sm:$0xff]
        %v690 = vld [vmem:[#allocation3 + $0x68] sm:$0xff]
        %v691 = vld [vmem:[#allocation3 + $0x70] sm:$0xff]
        %v692 = vld [vmem:[#allocation3 + $0x78] sm:$0xff]
        %v693 = vld [vmem:[#allocation3 + $0x80] sm:$0xff]
        %v694 = vld [vmem:[#allocation3 + $0x88] sm:$0xff]
        %v695 = vld [vmem:[#allocation3 + $0x90] sm:$0xff]
        %v696 = vld [vmem:[#allocation3 + $0x98] sm:$0xff]
        %v697 = vld [vmem:[#allocation3 + $0xa0] sm:$0xff]
        %v698 = vld [vmem:[#allocation3 + $0xa8] sm:$0xff]
        %vm699 = vcmask 719872
        %v701 = vsel %vm699, %v666, 0
        %v704 = vsel %vm699, %v667, 0
        %v707 = vsel %vm699, %v668, 0
        %v710 = vsel %vm699, %v669, 0
        %v713 = vsel %vm699, %v670, 0
        %v716 = vsel %vm699, %v671, 0
        %v719 = vsel %vm699, %v672, 0
        %v722 = vsel %vm699, %v673, 0
        %v725 = vsel %vm699, %v674, 0
        %v728 = vsel %vm699, %v675, 0
        %v731 = vsel %vm699, %v676, 0
        %733 = vmatpush.msra.mxu0 0.0
        %734 = vmatpush.msra.mxu0 0.0
        %735 = vmatpush.msra.mxu0 0.0
        %736 = vmatpush.msra.mxu0 0.0
        %737 = vmatpush.msra.mxu0 0.0
        %738 = vmatpush.msra.mxu0 %v697
        %739 = vmatpush.msra.mxu0 %v695
        %740 = vmatpush.msra.mxu0 %v693
        %741 = vmatpush.msra.mxu0 %v691
        %742 = vmatpush.msra.mxu0 %v689
        %743 = vmatpush.msra.mxu0 %v687
        %744 = vmatpush.msra.mxu0 %v685
        %745 = vmatpush.msra.mxu0 %v683
        %746 = vmatpush.msra.mxu0 %v681
        %747 = vmatpush.msra.mxu0 %v679
        %748 = vmatpush.msra.mxu0 %v677
        %749 = vmatmul.f32.gmra.mxu0 %v701
        %v750 = vpop.f32.mrf.mxu0
        %v751 = vadd.f32 0.0, %v750
        %752 = vmatmul.f32.gmra.mxu0 %v704
        %v753 = vpop.f32.mrf.mxu0
        %v754 = vadd.f32 0.0, %v753
        %755 = vmatmul.f32.gmra.mxu0 %v707
        %v756 = vpop.f32.mrf.mxu0
        %v757 = vadd.f32 0.0, %v756
        %758 = vmatmul.f32.gmra.mxu0 %v710
        %v759 = vpop.f32.mrf.mxu0
        %v760 = vadd.f32 0.0, %v759
        %761 = vmatmul.f32.gmra.mxu0 %v713
        %v762 = vpop.f32.mrf.mxu0
        %v763 = vadd.f32 0.0, %v762
        %764 = vmatmul.f32.gmra.mxu0 %v716
        %v765 = vpop.f32.mrf.mxu0
        %v766 = vadd.f32 0.0, %v765
        %767 = vmatmul.f32.gmra.mxu0 %v719
        %v768 = vpop.f32.mrf.mxu0
        %v769 = vadd.f32 0.0, %v768
        %770 = vmatmul.f32.gmra.mxu0 %v722
        %v771 = vpop.f32.mrf.mxu0
        %v772 = vadd.f32 0.0, %v771
        %773 = vmatmul.f32.gmra.mxu0 %v725
        %v774 = vpop.f32.mrf.mxu0
        %v775 = vadd.f32 0.0, %v774
        %776 = vmatmul.f32.gmra.mxu0 %v728
        %v777 = vpop.f32.mrf.mxu0
        %v778 = vadd.f32 0.0, %v777
        %779 = vmatmul.f32.gmra.mxu0 %v731
        %v780 = vpop.f32.mrf.mxu0
        %v781 = vadd.f32 0.0, %v780
        %782 = vdwg.mxu0
        %783 = vmatpush.msra.mxu0 0.0
        %784 = vmatpush.msra.mxu0 0.0
        %785 = vmatpush.msra.mxu0 0.0
        %786 = vmatpush.msra.mxu0 0.0
        %787 = vmatpush.msra.mxu0 0.0
        %788 = vmatpush.msra.mxu0 %v698
        %789 = vmatpush.msra.mxu0 %v696
        %790 = vmatpush.msra.mxu0 %v694
        %791 = vmatpush.msra.mxu0 %v692
        %792 = vmatpush.msra.mxu0 %v690
        %793 = vmatpush.msra.mxu0 %v688
        %794 = vmatpush.msra.mxu0 %v686
        %795 = vmatpush.msra.mxu0 %v684
        %796 = vmatpush.msra.mxu0 %v682
        %797 = vmatpush.msra.mxu0 %v680
        %798 = vmatpush.msra.mxu0 %v678
        %799 = vmatmul.f32.gmra.mxu0 %v701
        %v800 = vpop.f32.mrf.mxu0
        %v801 = vadd.f32 0.0, %v800
        %802 = vmatmul.f32.gmra.mxu0 %v704
        %v803 = vpop.f32.mrf.mxu0
        %v804 = vadd.f32 0.0, %v803
        %805 = vmatmul.f32.gmra.mxu0 %v707
        %v806 = vpop.f32.mrf.mxu0
        %v807 = vadd.f32 0.0, %v806
        %808 = vmatmul.f32.gmra.mxu0 %v710
        %v809 = vpop.f32.mrf.mxu0
        %v810 = vadd.f32 0.0, %v809
        %811 = vmatmul.f32.gmra.mxu0 %v713
        %v812 = vpop.f32.mrf.mxu0
        %v813 = vadd.f32 0.0, %v812
        %814 = vmatmul.f32.gmra.mxu0 %v716
        %v815 = vpop.f32.mrf.mxu0
        %v816 = vadd.f32 0.0, %v815
        %817 = vmatmul.f32.gmra.mxu0 %v719
        %v818 = vpop.f32.mrf.mxu0
        %v819 = vadd.f32 0.0, %v818
        %820 = vmatmul.f32.gmra.mxu0 %v722
        %v821 = vpop.f32.mrf.mxu0
        %v822 = vadd.f32 0.0, %v821
        %823 = vmatmul.f32.gmra.mxu0 %v725
        %v824 = vpop.f32.mrf.mxu0
        %v825 = vadd.f32 0.0, %v824
        %826 = vmatmul.f32.gmra.mxu0 %v728
        %v827 = vpop.f32.mrf.mxu0
        %v828 = vadd.f32 0.0, %v827
        %829 = vmatmul.f32.gmra.mxu0 %v731
        %v830 = vpop.f32.mrf.mxu0
        %v831 = vadd.f32 0.0, %v830
        %832 = vdwg.mxu0
        %833 = vst [vmem:[#allocation4] sm:$0xff] %v751
        %834 = vst [vmem:[#allocation4 + $0x8] sm:$0xff] %v801
        %835 = vst [vmem:[#allocation4 + $0x10] sm:$0xff] %v754
        %836 = vst [vmem:[#allocation4 + $0x18] sm:$0xff] %v804
        %837 = vst [vmem:[#allocation4 + $0x20] sm:$0xff] %v757
        %838 = vst [vmem:[#allocation4 + $0x28] sm:$0xff] %v807
        %839 = vst [vmem:[#allocation4 + $0x30] sm:$0xff] %v760
        %840 = vst [vmem:[#allocation4 + $0x38] sm:$0xff] %v810
        %841 = vst [vmem:[#allocation4 + $0x40] sm:$0xff] %v763
        %842 = vst [vmem:[#allocation4 + $0x48] sm:$0xff] %v813
        %843 = vst [vmem:[#allocation4 + $0x50] sm:$0xff] %v766
        %844 = vst [vmem:[#allocation4 + $0x58] sm:$0xff] %v816
        %845 = vst [vmem:[#allocation4 + $0x60] sm:$0xff] %v769
        %846 = vst [vmem:[#allocation4 + $0x68] sm:$0xff] %v819
        %847 = vst [vmem:[#allocation4 + $0x70] sm:$0xff] %v772
        %848 = vst [vmem:[#allocation4 + $0x78] sm:$0xff] %v822
        %849 = vst [vmem:[#allocation4 + $0x80] sm:$0xff] %v775
        %850 = vst [vmem:[#allocation4 + $0x88] sm:$0xff] %v825
        %851 = vst [vmem:[#allocation4 + $0x90] sm:$0xff] %v778
        %852 = vst [vmem:[#allocation4 + $0x98] sm:$0xff] %v828
        %853 = vst [vmem:[#allocation4 + $0xa0] sm:$0xff] %v781
        %854 = vst [vmem:[#allocation4 + $0xa8] sm:$0xff] %v831
        %v855 = vld [vmem:[%s6] sm:$0xff]
        %857 = vset.pattern.permute.xlu0 0
        %858 = vperm.xlu0 %857, %v855
        %v859 = vpop.permute.xlu0 %858
        %861 = vst [vmem:[%s404] sm:$0xff] %v859
        %v862 = vld [vmem:[%s404] sm:$0xff]
        %v863 = vld [vmem:[#allocation4] sm:$0xff]
        %v864 = vadd.f32 %v862, %v863
        %865 = vst [vmem:[%s404] sm:$0xff] %v864
        %v866 = vld [vmem:[%s404] sm:$0xff]
        %v867 = vld [vmem:[#allocation4 + $0x10] sm:$0xff]
        %v868 = vld [vmem:[#allocation4 + $0x18] sm:$0xff]
        %871 = vrot.lane.b32.xlu0 %v867, 127
        %v872 = vpop.permute.xlu0 %871
        %873 = vrot.lane.b32.xlu0 %v868, 127
        %v874 = vpop.permute.xlu0 %873
        %vm875 = vcmask 1039360
        %v876 = vsel %vm875, %v872, %v874
        %v878 = vadd.f32 %v866, %v876
        %879 = vst [vmem:[%s404] sm:$0xff] %v878
        %v880 = vld [vmem:[%s404] sm:$0xff]
        %v881 = vld [vmem:[#allocation4 + $0x20] sm:$0xff]
        %v882 = vld [vmem:[#allocation4 + $0x28] sm:$0xff]
        %885 = vrot.lane.b32.xlu0 %v881, 126
        %v886 = vpop.permute.xlu0 %885
        %887 = vrot.lane.b32.xlu0 %v882, 126
        %v888 = vpop.permute.xlu0 %887
        %vm889 = vcmask 1031168
        %v890 = vsel %vm889, %v886, %v888
        %v892 = vadd.f32 %v880, %v890
        %893 = vst [vmem:[%s404] sm:$0xff] %v892
        %v894 = vld [vmem:[%s404] sm:$0xff]
        %v895 = vld [vmem:[#allocation4 + $0x30] sm:$0xff]
        %v896 = vld [vmem:[#allocation4 + $0x38] sm:$0xff]
        %899 = vrot.lane.b32.xlu0 %v895, 125
        %v900 = vpop.permute.xlu0 %899
        %901 = vrot.lane.b32.xlu0 %v896, 125
        %v902 = vpop.permute.xlu0 %901
        %vm903 = vcmask 1022976
        %v904 = vsel %vm903, %v900, %v902
        %v906 = vadd.f32 %v894, %v904
        %907 = vst [vmem:[%s404] sm:$0xff] %v906
        %v908 = vld [vmem:[%s404] sm:$0xff]
        %v909 = vld [vmem:[#allocation4 + $0x40] sm:$0xff]
        %v910 = vld [vmem:[#allocation4 + $0x48] sm:$0xff]
        %913 = vrot.lane.b32.xlu0 %v909, 124
        %v914 = vpop.permute.xlu0 %913
        %915 = vrot.lane.b32.xlu0 %v910, 124
        %v916 = vpop.permute.xlu0 %915
        %vm917 = vcmask 1014784
        %v918 = vsel %vm917, %v914, %v916
        %v920 = vadd.f32 %v908, %v918
        %921 = vst [vmem:[%s404] sm:$0xff] %v920
        %v922 = vld [vmem:[%s404] sm:$0xff]
        %v923 = vld [vmem:[#allocation4 + $0x50] sm:$0xff]
        %v924 = vld [vmem:[#allocation4 + $0x58] sm:$0xff]
        %927 = vrot.lane.b32.xlu0 %v923, 123
        %v928 = vpop.permute.xlu0 %927
        %929 = vrot.lane.b32.xlu0 %v924, 123
        %v930 = vpop.permute.xlu0 %929
        %vm931 = vcmask 1006592
        %v932 = vsel %vm931, %v928, %v930
        %v934 = vadd.f32 %v922, %v932
        %935 = vst [vmem:[%s404] sm:$0xff] %v934
        %v936 = vld [vmem:[%s404] sm:$0xff]
        %v937 = vld [vmem:[#allocation4 + $0x60] sm:$0xff]
        %v938 = vld [vmem:[#allocation4 + $0x68] sm:$0xff]
        %941 = vrot.lane.b32.xlu0 %v937, 122
        %v942 = vpop.permute.xlu0 %941
        %943 = vrot.lane.b32.xlu0 %v938, 122
        %v944 = vpop.permute.xlu0 %943
        %vm945 = vcmask 998400
        %v946 = vsel %vm945, %v942, %v944
        %v948 = vadd.f32 %v936, %v946
        %949 = vst [vmem:[%s404] sm:$0xff] %v948
        %v950 = vld [vmem:[%s404] sm:$0xff]
        %v951 = vld [vmem:[#allocation4 + $0x70] sm:$0xff]
        %v952 = vld [vmem:[#allocation4 + $0x78] sm:$0xff]
        %955 = vrot.lane.b32.xlu0 %v951, 121
        %v956 = vpop.permute.xlu0 %955
        %957 = vrot.lane.b32.xlu0 %v952, 121
        %v958 = vpop.permute.xlu0 %957
        %vm959 = vcmask 990208
        %v960 = vsel %vm959, %v956, %v958
        %v962 = vadd.f32 %v950, %v960
        %963 = vst [vmem:[%s404] sm:$0xff] %v962
        %v964 = vld [vmem:[%s404] sm:$0xff]
        %v965 = vld [vmem:[#allocation4 + $0x80] sm:$0xff]
        %v966 = vld [vmem:[#allocation4 + $0x88] sm:$0xff]
        %969 = vrot.lane.b32.xlu0 %v965, 120
        %v970 = vpop.permute.xlu0 %969
        %971 = vrot.lane.b32.xlu0 %v966, 120
        %v972 = vpop.permute.xlu0 %971
        %vm973 = vcmask 982016
        %v974 = vsel %vm973, %v970, %v972
        %v976 = vadd.f32 %v964, %v974
        %977 = vst [vmem:[%s404] sm:$0xff] %v976
        %v978 = vld [vmem:[%s404] sm:$0xff]
        %v979 = vld [vmem:[#allocation4 + $0x90] sm:$0xff]
        %v980 = vld [vmem:[#allocation4 + $0x98] sm:$0xff]
        %983 = vrot.lane.b32.xlu0 %v979, 119
        %v984 = vpop.permute.xlu0 %983
        %985 = vrot.lane.b32.xlu0 %v980, 119
        %v986 = vpop.permute.xlu0 %985
        %vm987 = vcmask 973824
        %v988 = vsel %vm987, %v984, %v986
        %v990 = vadd.f32 %v978, %v988
        %991 = vst [vmem:[%s404] sm:$0xff] %v990
        %v992 = vld [vmem:[%s404] sm:$0xff]
        %v993 = vld [vmem:[#allocation4 + $0xa0] sm:$0xff]
        %v994 = vld [vmem:[#allocation4 + $0xa8] sm:$0xff]
        %997 = vrot.lane.b32.xlu0 %v993, 118
        %v998 = vpop.permute.xlu0 %997
        %999 = vrot.lane.b32.xlu0 %v994, 118
        %v1000 = vpop.permute.xlu0 %999
        %vm1001 = vcmask 965632
        %v1002 = vsel %vm1001, %v998, %v1000
        %v1004 = vadd.f32 %v992, %v1002
        %1005 = vst [vmem:[%s404] sm:$0xff] %v1004
        %v1006 = vld [vmem:[%s404] sm:$0xff]
        %v1007 = vmax.f32 %v1006, 0.0
        %1008 = vst [vmem:[%s404] sm:$0xff] %v1007
        %s1009 = sand.u32 %s218, 1
        %s1010 = scalar_lea.sflag [#allocation7], %s1009
        %s1011 = sand.u32 %s218, 1
        %s1012 = smul.addr %s1011, 8
        %s1013 = scalar_lea.vmem [#allocation11], %s1012
        // Predicated region
        $region61: #{tpu_custom_call.1} parent=47 // pred_check
          %p1014 = pneg %p228
        $region62: #{tpu_custom_call.1} parent=47 // pred_check_branch
          %1016 = sbr.rel (%p1014) target = $region64
        $region63: #{tpu_custom_call.1} parent=47 // pred_region
          %1018 = vsyncadd %s1010, 0
          %s1019 = smul.addr %s31, 4
          %s1020 = sadd.s32 %s32, %s1019
          %s1021 = smul.addr %s1020, 8
          %s1022 = scalar_lea.hbm %s7, %s1021
          %s1024 = sshll.u32 %s1013, 4
          %s1025 = int_to_ptr.vmem [resolvable:$true] %s1024
          %s1026 = sshll.u32 %s1022, 4
          %s1027 = int_to_ptr.hbm [resolvable:$true] %s1026
          %1029 = dma.vmem_to_hbm [thread:$0]  %s1025, 128, %s1027, %s1010
        $region64: #{tpu_custom_call.1} parent=47 // pred_fallthru
          _
      $region48: #{tpu_custom_call.1} parent=5 // pred_fallthru
        _
      %p1030 = scmp.le.s32.totalorder 2, %s22
      // Predicated region
      $region65: #{tpu_custom_call.1} parent=5 // pred_check
        %p1031 = pneg %p1030
      $region66: #{tpu_custom_call.1} parent=5 // pred_check_branch
        %1033 = sbr.rel (%p1031) target = $region68
      $region67: #{tpu_custom_call.1} parent=5 // pred_region
        %s1034 = ssub.s32 %s22, 2
        // Predicated region
        $region69: #{tpu_custom_call.1} parent=67 // pred_check
          %p1035 = pneg %p234
        $region70: #{tpu_custom_call.1} parent=67 // pred_check_branch
          %1037 = sbr.rel (%p1035) target = $region72
        $region71: #{tpu_custom_call.1} parent=67 // pred_region
          %s1038 = sand.u32 %s219, 1
          %s1039 = scalar_lea.sflag [#allocation7], %s1038
          %s1040 = sand.u32 %s219, 1
          %s1041 = smul.addr %s1040, 8
          %s1042 = scalar_lea.vmem [#allocation11], %s1041
          %1044 = dma.done %s1039, 128
        $region72: #{tpu_custom_call.1} parent=67 // pred_fallthru
          _
      $region68: #{tpu_custom_call.1} parent=5 // pred_fallthru
        _
    $region6: #{tpu_custom_call.1} parent=1 // loop_footer
      %s26 = sadd.s32 1, %s22
    $region7: #{tpu_custom_call.1} parent=1 // loop_footer_branch
      %21 = sbr.rel target = $region3
    $region8: #{tpu_custom_call.1} parent=1 // loop_exit
      _
    %1045 = vsyncpa [#allocation6], 1
    %s1046 = scalar_lea.sflag [#allocation6], 1
    %1047 = vsyncpa %s1046, 1
    %1048 = vsyncpa [#allocation9], 1
    %s1049 = scalar_lea.sflag [#allocation9], 1
    %1050 = vsyncpa %s1049, 1
    %1051 = vsyncpa [#allocation7], 1
    %s1052 = scalar_lea.sflag [#allocation7], 1
    %1053 = vsyncpa %s1052, 1

</llo_original>
